<compile_context>
chip_gen: v5e
topology: v5e:2x2
jax: 0.10.0
libtpu: 0.0.40
codegen_flags: <defaults>
</compile_context>

<pallas_src>
import functools

import jax
import jax.numpy as jnp
import numpy as np
from jax.experimental import pallas as pl
from jax.experimental.pallas import tpu as pltpu


def _round_up(x, m):
    return (x + m - 1) // m * m


def _choose_row_block(Mp, cap=512):
    """Largest multiple of 8 <= cap that divides Mp (Mp is a multiple of 8)."""
    bm = min(cap, Mp)
    while Mp % bm != 0:
        bm -= 8
    return bm


def _choose_col_block(Np, cap=1024):
    """Largest multiple of 128 <= cap that divides Np (Np is a multiple of 128)."""
    bn = min(cap, Np)
    bn -= bn % 128
    while Np % bn != 0:
        bn -= 128
    return bn


def _derive_time_block(T, per_step_bytes, budget_bytes=40 * 1024 * 1024, cap=64):
    """Largest TT <= cap dividing T whose pipelined blocks fit the VMEM budget."""
    tt = 1
    for cand in range(1, min(T, cap) + 1):
        if T % cand == 0 and cand * per_step_bytes <= budget_bytes:
            tt = cand
    return tt


def _const_block_spec(block_shape, index_map):
    """BlockSpec for a grid-constant operand; single-buffered if supported."""
    try:
        return pl.BlockSpec(block_shape, index_map, pipeline_mode=pl.Buffered(1))
    except Exception:  # older JAX without pipeline_mode / Buffered
        return pl.BlockSpec(block_shape, index_map)


# ----------------------------------------------------------------------------
# Lane-dense Linear: out = x @ w_t + b.  Used for the hoisted GRU input
# projection and for the final FC.  x is cast to the MXU compute dtype inside
# the kernel (avoids an extra HBM cast pass); accumulation / bias add are f32.
# ----------------------------------------------------------------------------
def _linear_kernel(x_ref, w_ref, b_ref, o_ref):
    x = x_ref[...].astype(w_ref.dtype)
    acc = jnp.dot(x, w_ref[...], preferred_element_type=jnp.float32) + b_ref[...]
    o_ref[...] = acc.astype(o_ref.dtype)


def pallas_linear(x, w_t, b, *, compute_dtype=jnp.bfloat16, out_dtype=jnp.float32,
                  block_m=512, block_n=1024):
    """x: (M, K); w_t: (K, N); b: (N,) -> (M, N) in out_dtype."""
    M, K = x.shape
    N = w_t.shape[1]
    Np = _round_up(N, 128)
    Mp = _round_up(M, 8)

    w_p = w_t.astype(compute_dtype)
    b_p = b.astype(jnp.float32).reshape(1, N)
    if Np != N:                                   # pad output columns to lanes
        w_p = jnp.zeros((K, Np), compute_dtype).at[:, :N].set(w_p)
        b_p = jnp.zeros((1, Np), jnp.float32).at[:, :N].set(b_p)
    x_p = x
    if Mp != M:                                   # pad rows to sublanes
        x_p = jnp.zeros((Mp, K), x.dtype).at[:M].set(x)

    bm = _choose_row_block(Mp, block_m)
    bn = _choose_col_block(Np, block_n)

    out = pl.pallas_call(
        _linear_kernel,
        out_shape=jax.ShapeDtypeStruct((Mp, Np), out_dtype),
        grid_spec=pltpu.PrefetchScalarGridSpec(
            num_scalar_prefetch=0,
            grid=(Mp // bm, Np // bn),
            in_specs=[
                pl.BlockSpec((bm, K), lambda i, j: (i, 0)),
                pl.BlockSpec((K, bn), lambda i, j: (0, j)),
                pl.BlockSpec((1, bn), lambda i, j: (0, j)),
            ],
            out_specs=pl.BlockSpec((bm, bn), lambda i, j: (i, j)),
        ),
        compiler_params=pltpu.CompilerParams(
            dimension_semantics=("parallel", "parallel")),
    )(x_p, w_p, b_p)
    if Mp != M or Np != N:
        out = out[:M, :N]
    return out


# ----------------------------------------------------------------------------
# Recurrent GRU kernel.  Grid = (batch blocks, time blocks); hidden state is
# VMEM-resident; ONE fused (BB, Dp) x (Dp, 3*Dp) dot per serial timestep, gate
# slices at static lane offsets.  Gate order matches PyTorch nn.GRU (r, z, n).
# b_hr / b_hz are already folded into gi; only b_hn is applied in-kernel.
# ----------------------------------------------------------------------------
def _gru_block_kernel(h0_ref, gi_ref, whh_ref, bhn_ref, y_ref, hT_ref, h_scratch):
    s = pl.program_id(1)                       # time-block index (inner, serial)

    @pl.when(s == 0)
    def _():
        h_scratch[...] = h0_ref[...]

    TT = y_ref.shape[0]
    Dp = y_ref.shape[2]
    whh = whh_ref[...]                          # (Dp, 3*Dp), compute dtype
    b_n = bhn_ref[...]                          # (1, Dp), f32
    cdt = whh.dtype

    def step(tt, h):
        hc = h.astype(cdt)                      # bf16 copy for the MXU
        gh = jnp.dot(hc, whh, preferred_element_type=jnp.float32)   # (BB, 3*Dp)
        gh_r = gh[:, 0:Dp]
        gh_z = gh[:, Dp:2 * Dp]
        gh_n = gh[:, 2 * Dp:3 * Dp]
        gi = gi_ref[tt].astype(jnp.float32)     # (BB, 3*Dp)
        r = jax.nn.sigmoid(gi[:, 0:Dp] + gh_r)
        z = jax.nn.sigmoid(gi[:, Dp:2 * Dp] + gh_z)
        n = jnp.tanh(gi[:, 2 * Dp:3 * Dp] + r * (gh_n + b_n))
        h_new = (1.0 - z) * n + z * h
        y_ref[tt] = h_new.astype(y_ref.dtype)
        return h_new

    unroll = True if TT <= 8 else 8             # cap vreg pressure for large TT
    h_last = jax.lax.fori_loop(0, TT, step, h_scratch[...], unroll=unroll)
    h_scratch[...] = h_last

    @pl.when(s == pl.num_programs(1) - 1)
    def _():
        hT_ref[...] = h_last.astype(hT_ref.dtype)


def gru_layer(x_tbd, h0_p, wih_pT, b_fused, whh_pT, bhn_p, *,
              compute_dtype=jnp.bfloat16, gi_dtype=jnp.bfloat16):
    """x_tbd: (T, Bp, Dp) f32 (padded); h0_p: (Bp, Dp) f32 -> (y, hT)."""
    T, Bp, Dp = x_tbd.shape

    # Hoisted input projection (off the serial path): one lane-dense matmul
    # over all T*Bp rows, emitting the padded per-gate layout directly.
    gi = pallas_linear(x_tbd.reshape(T * Bp, Dp), wih_pT, b_fused,
                       compute_dtype=compute_dtype, out_dtype=gi_dtype)
    gi = gi.reshape(T, Bp, 3 * Dp)              # contiguous reshape, no copy

    whh = whh_pT.astype(compute_dtype)

    # Batch blocks: >=2 lets v7x's two TensorCores run independent slices.
    NB = 2 if (Bp >= 16 and Bp % 16 == 0) else 1
    BB = Bp // NB

    gi_item = jnp.dtype(gi_dtype).itemsize
    per_t = 2 * BB * 3 * Dp * gi_item + 2 * BB * Dp * 4   # double-buffered gi + y
    TT = _derive_time_block(T, per_t)
    S = T // TT
    fixed = (Dp * 3 * Dp * jnp.dtype(compute_dtype).itemsize   # W_hh (1 buffer)
             + 3 * BB * Dp * 4 + 2 * Dp * 4)                   # h0 + scratch + b_hn
    vmem_limit = int(min(64 * 1024 * 1024,
                         max(32 * 1024 * 1024, (TT * per_t + fixed) * 3 // 2)))

    y, hT = pl.pallas_call(
        _gru_block_kernel,
        out_shape=(jax.ShapeDtypeStruct((T, Bp, Dp), jnp.float32),
                   jax.ShapeDtypeStruct((Bp, Dp), jnp.float32)),
        grid_spec=pltpu.PrefetchScalarGridSpec(
            num_scalar_prefetch=0,
            grid=(NB, S),
            in_specs=[
                pl.BlockSpec((BB, Dp), lambda b, s: (b, 0)),              # h0
                pl.BlockSpec((TT, BB, 3 * Dp), lambda b, s: (s, b, 0)),   # gi
                _const_block_spec((Dp, 3 * Dp), lambda b, s: (0, 0)),     # W_hh
                _const_block_spec((1, Dp), lambda b, s: (0, 0)),          # b_hn
            ],
            out_specs=(
                pl.BlockSpec((TT, BB, Dp), lambda b, s: (s, b, 0)),       # y
                pl.BlockSpec((BB, Dp), lambda b, s: (b, 0)),              # hT
            ),
            scratch_shapes=[pltpu.VMEM((BB, Dp), jnp.float32)],
        ),
        compiler_params=pltpu.CompilerParams(
            dimension_semantics=("parallel", "arbitrary"),   # batch ||, time serial
            vmem_limit_bytes=vmem_limit),
    )(h0_p, gi, whh, bhn_p)
    return y, hT


# ----------------------------------------------------------------------------
# Per-layer weight preparation: per-gate lane-padded layouts, b_hr/b_hz folded
# into the hoisted projection bias.
# ----------------------------------------------------------------------------
def _prep_gru_layer(w_ih, w_hh, b_ih, b_hh, D, Dp):
    wih_pT = jnp.zeros((Dp, 3 * Dp), jnp.float32)
    whh_pT = jnp.zeros((Dp, 3 * Dp), jnp.float32)
    b_fused = jnp.zeros((3 * Dp,), jnp.float32)
    for g in range(3):                                  # gate order: r, z, n
        wih_pT = wih_pT.at[:D, g * Dp:g * Dp + D].set(w_ih[g * D:(g + 1) * D, :].T)
        whh_pT = whh_pT.at[:D, g * Dp:g * Dp + D].set(w_hh[g * D:(g + 1) * D, :].T)
        bg = b_ih[g * D:(g + 1) * D]
        if g < 2:                                       # fold b_hr / b_hz
            bg = bg + b_hh[g * D:(g + 1) * D]
        b_fused = b_fused.at[g * Dp:g * Dp + D].set(bg)
    bhn_p = jnp.zeros((1, Dp), jnp.float32).at[0, :D].set(b_hh[2 * D:3 * D])
    return wih_pT, b_fused, whh_pT, bhn_p


# ----------------------------------------------------------------------------
# Full module forward: Embedding -> num_layers x GRU -> Linear.
# ----------------------------------------------------------------------------
def rnn_forward(params, ids, h0=None, *, compute_dtype=jnp.bfloat16):
    emb = params["emb"]                                   # (vocab, d_model)
    B, T = ids.shape
    D = emb.shape[1]
    L = len(params["gru"])
    Dp = _round_up(D, 128)
    Bp = _round_up(B, 8)

    # TODO(synk): the embedding row-gather stays as jnp.take (XLA); a Pallas
    # scalar-prefetch gather kernel is not worthwhile at these sizes.
    # Gather directly in time-major order so no (B,T,D)<->(T,B,D) activation
    # transpose is ever materialized.
    x = jnp.take(emb, ids.T, axis=0).astype(jnp.float32)  # (T, B, D)
    if (Bp, Dp) != (B, D):                                # pad sublanes / lanes once
        x = jnp.zeros((T, Bp, Dp), jnp.float32).at[:, :B, :D].set(x)

    if h0 is None:
        h0_p = jnp.zeros((L, Bp, Dp), jnp.float32)
    else:
        h0_p = jnp.zeros((L, Bp, Dp), jnp.float32).at[:, :B, :D].set(
            h0.astype(jnp.float32))

    gi_dtype = (jnp.float32 if jnp.dtype(compute_dtype) == jnp.dtype(jnp.float32)
                else jnp.bfloat16)

    inp = x
    h_finals = []
    for l in range(L):
        w_ih, w_hh, b_ih, b_hh = params["gru"][l]
        wih_pT, b_fused, whh_pT, bhn_p = _prep_gru_layer(w_ih, w_hh, b_ih, b_hh, D, Dp)
        inp, hT = gru_layer(inp, h0_p[l], wih_pT, b_fused, whh_pT, bhn_p,
                            compute_dtype=compute_dtype, gi_dtype=gi_dtype)
        h_finals.append(hT)
    h_n = jnp.stack(h_finals, axis=0)[:, :B, :D]          # (L, B, D)

    # Final FC over all T*Bp rows (padded batch rows sliced off afterwards).
    w_fc, b_fc = params["fc"]
    out_dim = w_fc.shape[0]
    w_fc_T = (jnp.zeros((Dp, out_dim), jnp.float32).at[:D].set(w_fc.T)
              if Dp != D else w_fc.T)
    out = pallas_linear(inp.reshape(T * Bp, Dp), w_fc_T, b_fc,
                        compute_dtype=compute_dtype, out_dtype=jnp.float32)
    out = out.reshape(T, Bp, out_dim)[:, :B]
    out = jnp.transpose(out, (1, 0, 2))                    # (B, T, out_dim)
    return out, h_n


# ----------------------------------------------------------------------------
# Deterministic parameter init (PyTorch-style shapes / distributions).
# ----------------------------------------------------------------------------
def init_params(key, vocab_size, d_model, out_dim, num_layers):
    ks = list(jax.random.split(key, 1 + 4 * num_layers + 2))
    k = 1.0 / np.sqrt(d_model)
    params = {}
    params["emb"] = jax.random.normal(ks[0], (vocab_size, d_model), jnp.float32)
    gru = []
    idx = 1
    for _ in range(num_layers):
        d_in = d_model
        w_ih = jax.random.uniform(ks[idx + 0], (3 * d_model, d_in), jnp.float32, -k, k)
        w_hh = jax.random.uniform(ks[idx + 1], (3 * d_model, d_model), jnp.float32, -k, k)
        b_ih = jax.random.uniform(ks[idx + 2], (3 * d_model,), jnp.float32, -k, k)
        b_hh = jax.random.uniform(ks[idx + 3], (3 * d_model,), jnp.float32, -k, k)
        gru.append((w_ih, w_hh, b_ih, b_hh))
        idx += 4
    params["gru"] = gru
    w_fc = jax.random.uniform(ks[idx], (out_dim, d_model), jnp.float32, -k, k)
    b_fc = jax.random.uniform(ks[idx + 1], (out_dim,), jnp.float32, -k, k)
    params["fc"] = (w_fc, b_fc)
    return params


# ----------------------------------------------------------------------------
# Pure-JAX reference (same precision policy: matmul operands in compute_dtype,
# f32 accumulation / gate math).  Matches torch.nn.GRU semantics.
# ----------------------------------------------------------------------------
def rnn_reference(params, ids, compute_dtype=jnp.float32):
    def mm(a, bmat):
        return jnp.dot(a.astype(compute_dtype), bmat.astype(compute_dtype),
                       preferred_element_type=jnp.float32)

    x = jnp.take(params["emb"], ids, axis=0)               # (B, T, D)
    B, T, D = x.shape
    inp = x.astype(jnp.float32)
    h_finals = []
    for (w_ih, w_hh, b_ih, b_hh) in params["gru"]:
        def step(h, x_t, w_ih=w_ih, w_hh=w_hh, b_ih=b_ih, b_hh=b_hh):
            gi = mm(x_t, w_ih.T) + b_ih
            gh = mm(h, w_hh.T) + b_hh
            i_r, i_z, i_n = jnp.split(gi, 3, axis=-1)
            h_r, h_z, h_nn = jnp.split(gh, 3, axis=-1)
            r = jax.nn.sigmoid(i_r + h_r)
            z = jax.nn.sigmoid(i_z + h_z)
            n = jnp.tanh(i_n + r * h_nn)
            h_new = (1.0 - z) * n + z * h
            return h_new, h_new
        hT, ys = jax.lax.scan(step, jnp.zeros((B, D), jnp.float32),
                              jnp.transpose(inp, (1, 0, 2)))
        inp = jnp.transpose(ys, (1, 0, 2))
        h_finals.append(hT)
    w_fc, b_fc = params["fc"]
    out = mm(inp, w_fc.T) + b_fc
    return out, jnp.stack(h_finals, axis=0)


if __name__ == "__main__":
    vocab_size = 16
    b, t = 2, 8
    d_model = 32
    num_layers = 3

    key = jax.random.PRNGKey(0)
    k_param, k_ids = jax.random.split(key)
    params = init_params(k_param, vocab_size, d_model, vocab_size, num_layers)
    ids = jax.random.randint(k_ids, (b, t), 0, vocab_size, dtype=jnp.int32)

    # Main path: bf16 MXU operands / bf16 gi storage, f32 accumulation & state.
    fwd_bf16 = jax.jit(functools.partial(rnn_forward, compute_dtype=jnp.bfloat16))
    out, h_n = fwd_bf16(params, ids)
    out = jax.block_until_ready(out)
    h_n = jax.block_until_ready(h_n)
    assert out.shape == (b, t, vocab_size)
    assert h_n.shape == (num_layers, b, d_model)

    out_ref, h_ref = rnn_reference(params, ids, compute_dtype=jnp.bfloat16)
    np.testing.assert_allclose(np.asarray(out), np.asarray(out_ref), atol=2e-2, rtol=2e-2)
    np.testing.assert_allclose(np.asarray(h_n), np.asarray(h_ref), atol=2e-2, rtol=2e-2)

    # Strict f32 semantic check against the pure-JAX GRU reference.
    fwd_f32 = jax.jit(functools.partial(rnn_forward, compute_dtype=jnp.float32))
    out32, h32 = fwd_f32(params, ids)
    out32 = jax.block_until_ready(out32)
    h32 = jax.block_until_ready(h32)
    out_ref32, h_ref32 = rnn_reference(params, ids, compute_dtype=jnp.float32)
    np.testing.assert_allclose(np.asarray(out32), np.asarray(out_ref32), atol=5e-4, rtol=5e-4)
    np.testing.assert_allclose(np.asarray(h32), np.asarray(h_ref32), atol=5e-4, rtol=5e-4)

    print("KERNEL_OK")
</pallas_src>

<mosaic_0001>
module attributes {stable_mosaic.version = 11 : i64} {
  func.func @_linear_kernel(%arg0: i32, %arg1: i32, %arg2: memref<64x128xf32, #tpu.memory_space<vmem>>, %arg3: memref<128x384xbf16, #tpu.memory_space<vmem>>, %arg4: memref<1x384xf32, #tpu.memory_space<vmem>>, %arg5: memref<64x384xbf16, #tpu.memory_space<vmem>>) attributes {dimension_semantics = [#tpu.dimension_semantics<parallel>, #tpu.dimension_semantics<parallel>], iteration_bounds = array<i64: 1, 1>, scalar_prefetch = 0 : i64, scratch_operands = 0 : i64, tpu.core_type = #tpu.core_type<tc>, window_params = [{transform_indices = @transform_0, window_bounds = array<i64: 64, 128>}, {transform_indices = @transform_1, window_bounds = array<i64: 128, 384>}, {transform_indices = @transform_2, window_bounds = array<i64: 1, 384>}, {transform_indices = @transform_3, window_bounds = array<i64: 64, 384>}]} {
    %c0 = arith.constant 0 : index
    %c0_0 = arith.constant 0 : index
    %0 = vector.load %arg2[%c0, %c0_0] : memref<64x128xf32, #tpu.memory_space<vmem>>, vector<64x128xf32>
    %1 = arith.truncf %0 : vector<64x128xf32> to vector<64x128xbf16>
    %c0_1 = arith.constant 0 : index
    %c0_2 = arith.constant 0 : index
    %2 = vector.load %arg3[%c0_1, %c0_2] : memref<128x384xbf16, #tpu.memory_space<vmem>>, vector<128x384xbf16>
    %cst = arith.constant dense<0.000000e+00> : vector<64x384xf32>
    %3 = tpu.matmul %1, %2, %cst {dimension_numbers = #tpu.dot_dimension_numbers<[1], [0], [0], [1], [0, 0, 1, 1], [], []>} : vector<64x128xbf16>, vector<128x384xbf16>, vector<64x384xf32> -> vector<64x384xf32>
    %c0_3 = arith.constant 0 : index
    %c0_4 = arith.constant 0 : index
    %4 = vector.load %arg4[%c0_3, %c0_4] : memref<1x384xf32, #tpu.memory_space<vmem>>, vector<1x384xf32>
    %5 = vector.broadcast %4 : vector<1x384xf32> to vector<64x384xf32>
    %6 = arith.addf %3, %5 : vector<64x384xf32>
    %7 = arith.truncf %6 : vector<64x384xf32> to vector<64x384xbf16>
    %c0_5 = arith.constant 0 : index
    %c0_6 = arith.constant 0 : index
    %8 = vector.load %arg5[%c0_5, %c0_6] : memref<64x384xbf16, #tpu.memory_space<vmem>>, vector<64x384xbf16>
    tpu.vector_store %arg5[%c0_5, %c0_6], %7 {strides = array<i32>} : memref<64x384xbf16, #tpu.memory_space<vmem>>, vector<64x384xbf16>,
    return
  }
  func.func @transform_0(%arg0: i32, %arg1: i32) -> (i32, i32) {
    %c0_i32 = arith.constant 0 : i32
    %c0_i32_0 = arith.constant 0 : i32
    return %arg0, %c0_i32 : i32, i32
  }
  func.func @transform_1(%arg0: i32, %arg1: i32) -> (i32, i32) {
    %c0_i32 = arith.constant 0 : i32
    %c0_i32_0 = arith.constant 0 : i32
    return %c0_i32, %arg1 : i32, i32
  }
  func.func @transform_2(%arg0: i32, %arg1: i32) -> (i32, i32) {
    %c0_i32 = arith.constant 0 : i32
    %c0_i32_0 = arith.constant 0 : i32
    return %c0_i32, %arg1 : i32, i32
  }
  func.func @transform_3(%arg0: i32, %arg1: i32) -> (i32, i32) {
    %c0_i32 = arith.constant 0 : i32
    return %arg0, %arg1 : i32, i32
  }
}

module attributes {stable_mosaic.version = 11 : i64} {
  func.func @_gru_block_kernel(%arg0: i32, %arg1: i32, %arg2: memref<8x128xf32, #tpu.memory_space<vmem>>, %arg3: memref<8x8x384xbf16, #tpu.memory_space<vmem>>, %arg4: memref<128x384xbf16, #tpu.memory_space<vmem>>, %arg5: memref<1x128xf32, #tpu.memory_space<vmem>>, %arg6: memref<8x8x128xf32, #tpu.memory_space<vmem>>, %arg7: memref<8x128xf32, #tpu.memory_space<vmem>>, %arg8: memref<8x128xf32, #tpu.memory_space<vmem>>) attributes {dimension_semantics = [#tpu.dimension_semantics<parallel>, #tpu.dimension_semantics<arbitrary>], iteration_bounds = array<i64: 1, 1>, scalar_prefetch = 0 : i64, scratch_operands = 1 : i64, tpu.core_type = #tpu.core_type<tc>, window_params = [{transform_indices = @transform_0, window_bounds = array<i64: 8, 128>}, {transform_indices = @transform_1, window_bounds = array<i64: 8, 8, 384>}, {pipeline_mode = #tpu.pipeline_mode<synchronous>, transform_indices = @transform_2, window_bounds = array<i64: 128, 384>}, {pipeline_mode = #tpu.pipeline_mode<synchronous>, transform_indices = @transform_3, window_bounds = array<i64: 1, 128>}, {transform_indices = @transform_4, window_bounds = array<i64: 8, 8, 128>}, {transform_indices = @transform_5, window_bounds = array<i64: 8, 128>}]} {
    %c0_i32 = arith.constant 0 : i32
    %0 = arith.cmpi eq, %arg1, %c0_i32 : i32
    %1 = arith.extui %0 : i1 to i32
    %c0_i32_0 = arith.constant 0 : i32
    %2 = arith.cmpi ne, %1, %c0_i32_0 : i32
    scf.if %2 {
      %c0_74 = arith.constant 0 : index
      %c0_75 = arith.constant 0 : index
      %314 = vector.load %arg2[%c0_74, %c0_75] : memref<8x128xf32, #tpu.memory_space<vmem>>, vector<8x128xf32>
      %c0_76 = arith.constant 0 : index
      %c0_77 = arith.constant 0 : index
      %315 = vector.load %arg8[%c0_76, %c0_77] : memref<8x128xf32, #tpu.memory_space<vmem>>, vector<8x128xf32>
      tpu.vector_store %arg8[%c0_76, %c0_77], %314 {strides = array<i32>} : memref<8x128xf32, #tpu.memory_space<vmem>>, vector<8x128xf32>,
    } else {
    }
    %c0 = arith.constant 0 : index
    %c0_1 = arith.constant 0 : index
    %3 = vector.load %arg4[%c0, %c0_1] : memref<128x384xbf16, #tpu.memory_space<vmem>>, vector<128x384xbf16>
    %c0_2 = arith.constant 0 : index
    %c0_3 = arith.constant 0 : index
    %4 = vector.load %arg5[%c0_2, %c0_3] : memref<1x128xf32, #tpu.memory_space<vmem>>, vector<1x128xf32>
    %c0_4 = arith.constant 0 : index
    %c0_5 = arith.constant 0 : index
    %5 = vector.load %arg8[%c0_4, %c0_5] : memref<8x128xf32, #tpu.memory_space<vmem>>, vector<8x128xf32>
    %c0_i32_6 = arith.constant 0 : i32
    %6 = arith.truncf %5 : vector<8x128xf32> to vector<8x128xbf16>
    %cst = arith.constant dense<0.000000e+00> : vector<8x384xf32>
    %7 = tpu.matmul %6, %3, %cst {dimension_numbers = #tpu.dot_dimension_numbers<[1], [0], [0], [1], [0, 0, 1, 1], [], []>} : vector<8x128xbf16>, vector<128x384xbf16>, vector<8x384xf32> -> vector<8x384xf32>
    %8 = vector.extract_strided_slice %7 {offsets = [0, 0], sizes = [8, 128], strides = [1, 1]} : vector<8x384xf32> to vector<8x128xf32>
    %9 = vector.extract_strided_slice %7 {offsets = [0, 128], sizes = [8, 128], strides = [1, 1]} : vector<8x384xf32> to vector<8x128xf32>
    %10 = vector.extract_strided_slice %7 {offsets = [0, 256], sizes = [8, 128], strides = [1, 1]} : vector<8x384xf32> to vector<8x128xf32>
    %11 = arith.index_cast %c0_i32_6 : i32 to index
    %c0_7 = arith.constant 0 : index
    %c0_8 = arith.constant 0 : index
    %12 = vector.load %arg3[%11, %c0_7, %c0_8] : memref<8x8x384xbf16, #tpu.memory_space<vmem>>, vector<1x8x384xbf16>
    %13 = vector.shape_cast %12 : vector<1x8x384xbf16> to vector<8x384xbf16>
    %14 = arith.extf %13 : vector<8x384xbf16> to vector<8x384xf32>
    %15 = vector.extract_strided_slice %14 {offsets = [0, 0], sizes = [8, 128], strides = [1, 1]} : vector<8x384xf32> to vector<8x128xf32>
    %16 = arith.addf %15, %8 : vector<8x128xf32>
    %17 = arith.negf %16 : vector<8x128xf32>
    %18 = math.exp %17 : vector<8x128xf32>
    %cst_9 = arith.constant 1.000000e+00 : f32
    %19 = vector.broadcast %cst_9 : f32 to vector<8x128xf32>
    %20 = arith.addf %19, %18 : vector<8x128xf32>
    %21 = arith.divf %19, %20 : vector<8x128xf32>
    %22 = vector.extract_strided_slice %14 {offsets = [0, 128], sizes = [8, 128], strides = [1, 1]} : vector<8x384xf32> to vector<8x128xf32>
    %23 = arith.addf %22, %9 : vector<8x128xf32>
    %24 = arith.negf %23 : vector<8x128xf32>
    %25 = math.exp %24 : vector<8x128xf32>
    %cst_10 = arith.constant 1.000000e+00 : f32
    %26 = vector.broadcast %cst_10 : f32 to vector<8x128xf32>
    %27 = arith.addf %26, %25 : vector<8x128xf32>
    %28 = arith.divf %26, %27 : vector<8x128xf32>
    %29 = vector.extract_strided_slice %14 {offsets = [0, 256], sizes = [8, 128], strides = [1, 1]} : vector<8x384xf32> to vector<8x128xf32>
    %30 = vector.broadcast %4 : vector<1x128xf32> to vector<8x128xf32>
    %31 = arith.addf %10, %30 : vector<8x128xf32>
    %32 = arith.mulf %21, %31 : vector<8x128xf32>
    %33 = arith.addf %29, %32 : vector<8x128xf32>
    %34 = math.tanh %33 : vector<8x128xf32>
    %cst_11 = arith.constant 1.000000e+00 : f32
    %35 = vector.broadcast %cst_11 : f32 to vector<8x128xf32>
    %36 = arith.subf %35, %28 : vector<8x128xf32>
    %37 = arith.mulf %36, %34 : vector<8x128xf32>
    %38 = arith.mulf %28, %5 : vector<8x128xf32>
    %39 = arith.addf %37, %38 : vector<8x128xf32>
    %40 = arith.index_cast %c0_i32_6 : i32 to index
    %c0_12 = arith.constant 0 : index
    %c0_13 = arith.constant 0 : index
    %41 = vector.load %arg6[%40, %c0_12, %c0_13] : memref<8x8x128xf32, #tpu.memory_space<vmem>>, vector<1x8x128xf32>
    %42 = vector.shape_cast %41 : vector<1x8x128xf32> to vector<8x128xf32>
    %43 = vector.shape_cast %39 : vector<8x128xf32> to vector<1x8x128xf32>
    tpu.vector_store %arg6[%40, %c0_12, %c0_13], %43 {strides = array<i32>} : memref<8x8x128xf32, #tpu.memory_space<vmem>>, vector<1x8x128xf32>,
    %c1_i32 = arith.constant 1 : i32
    %44 = arith.truncf %39 : vector<8x128xf32> to vector<8x128xbf16>
    %cst_14 = arith.constant dense<0.000000e+00> : vector<8x384xf32>
    %45 = tpu.matmul %44, %3, %cst_14 {dimension_numbers = #tpu.dot_dimension_numbers<[1], [0], [0], [1], [0, 0, 1, 1], [], []>} : vector<8x128xbf16>, vector<128x384xbf16>, vector<8x384xf32> -> vector<8x384xf32>
    %46 = vector.extract_strided_slice %45 {offsets = [0, 0], sizes = [8, 128], strides = [1, 1]} : vector<8x384xf32> to vector<8x128xf32>
    %47 = vector.extract_strided_slice %45 {offsets = [0, 128], sizes = [8, 128], strides = [1, 1]} : vector<8x384xf32> to vector<8x128xf32>
    %48 = vector.extract_strided_slice %45 {offsets = [0, 256], sizes = [8, 128], strides = [1, 1]} : vector<8x384xf32> to vector<8x128xf32>
    %49 = arith.index_cast %c1_i32 : i32 to index
    %c0_15 = arith.constant 0 : index
    %c0_16 = arith.constant 0 : index
    %50 = vector.load %arg3[%49, %c0_15, %c0_16] : memref<8x8x384xbf16, #tpu.memory_space<vmem>>, vector<1x8x384xbf16>
    %51 = vector.shape_cast %50 : vector<1x8x384xbf16> to vector<8x384xbf16>
    %52 = arith.extf %51 : vector<8x384xbf16> to vector<8x384xf32>
    %53 = vector.extract_strided_slice %52 {offsets = [0, 0], sizes = [8, 128], strides = [1, 1]} : vector<8x384xf32> to vector<8x128xf32>
    %54 = arith.addf %53, %46 : vector<8x128xf32>
    %55 = arith.negf %54 : vector<8x128xf32>
    %56 = math.exp %55 : vector<8x128xf32>
    %cst_17 = arith.constant 1.000000e+00 : f32
    %57 = vector.broadcast %cst_17 : f32 to vector<8x128xf32>
    %58 = arith.addf %57, %56 : vector<8x128xf32>
    %59 = arith.divf %57, %58 : vector<8x128xf32>
    %60 = vector.extract_strided_slice %52 {offsets = [0, 128], sizes = [8, 128], strides = [1, 1]} : vector<8x384xf32> to vector<8x128xf32>
    %61 = arith.addf %60, %47 : vector<8x128xf32>
    %62 = arith.negf %61 : vector<8x128xf32>
    %63 = math.exp %62 : vector<8x128xf32>
    %cst_18 = arith.constant 1.000000e+00 : f32
    %64 = vector.broadcast %cst_18 : f32 to vector<8x128xf32>
    %65 = arith.addf %64, %63 : vector<8x128xf32>
    %66 = arith.divf %64, %65 : vector<8x128xf32>
    %67 = vector.extract_strided_slice %52 {offsets = [0, 256], sizes = [8, 128], strides = [1, 1]} : vector<8x384xf32> to vector<8x128xf32>
    %68 = vector.broadcast %4 : vector<1x128xf32> to vector<8x128xf32>
    %69 = arith.addf %48, %68 : vector<8x128xf32>
    %70 = arith.mulf %59, %69 : vector<8x128xf32>
    %71 = arith.addf %67, %70 : vector<8x128xf32>
    %72 = math.tanh %71 : vector<8x128xf32>
    %cst_19 = arith.constant 1.000000e+00 : f32
    %73 = vector.broadcast %cst_19 : f32 to vector<8x128xf32>
    %74 = arith.subf %73, %66 : vector<8x128xf32>
    %75 = arith.mulf %74, %72 : vector<8x128xf32>
    %76 = arith.mulf %66, %39 : vector<8x128xf32>
    %77 = arith.addf %75, %76 : vector<8x128xf32>
    %78 = arith.index_cast %c1_i32 : i32 to index
    %c0_20 = arith.constant 0 : index
    %c0_21 = arith.constant 0 : index
    %79 = vector.load %arg6[%78, %c0_20, %c0_21] : memref<8x8x128xf32, #tpu.memory_space<vmem>>, vector<1x8x128xf32>
    %80 = vector.shape_cast %79 : vector<1x8x128xf32> to vector<8x128xf32>
    %81 = vector.shape_cast %77 : vector<8x128xf32> to vector<1x8x128xf32>
    tpu.vector_store %arg6[%78, %c0_20, %c0_21], %81 {strides = array<i32>} : memref<8x8x128xf32, #tpu.memory_space<vmem>>, vector<1x8x128xf32>,
    %c2_i32 = arith.constant 2 : i32
    %82 = arith.truncf %77 : vector<8x128xf32> to vector<8x128xbf16>
    %cst_22 = arith.constant dense<0.000000e+00> : vector<8x384xf32>
    %83 = tpu.matmul %82, %3, %cst_22 {dimension_numbers = #tpu.dot_dimension_numbers<[1], [0], [0], [1], [0, 0, 1, 1], [], []>} : vector<8x128xbf16>, vector<128x384xbf16>, vector<8x384xf32> -> vector<8x384xf32>
    %84 = vector.extract_strided_slice %83 {offsets = [0, 0], sizes = [8, 128], strides = [1, 1]} : vector<8x384xf32> to vector<8x128xf32>
    %85 = vector.extract_strided_slice %83 {offsets = [0, 128], sizes = [8, 128], strides = [1, 1]} : vector<8x384xf32> to vector<8x128xf32>
    %86 = vector.extract_strided_slice %83 {offsets = [0, 256], sizes = [8, 128], strides = [1, 1]} : vector<8x384xf32> to vector<8x128xf32>
    %87 = arith.index_cast %c2_i32 : i32 to index
    %c0_23 = arith.constant 0 : index
    %c0_24 = arith.constant 0 : index
    %88 = vector.load %arg3[%87, %c0_23, %c0_24] : memref<8x8x384xbf16, #tpu.memory_space<vmem>>, vector<1x8x384xbf16>
    %89 = vector.shape_cast %88 : vector<1x8x384xbf16> to vector<8x384xbf16>
    %90 = arith.extf %89 : vector<8x384xbf16> to vector<8x384xf32>
    %91 = vector.extract_strided_slice %90 {offsets = [0, 0], sizes = [8, 128], strides = [1, 1]} : vector<8x384xf32> to vector<8x128xf32>
    %92 = arith.addf %91, %84 : vector<8x128xf32>
    %93 = arith.negf %92 : vector<8x128xf32>
    %94 = math.exp %93 : vector<8x128xf32>
    %cst_25 = arith.constant 1.000000e+00 : f32
    %95 = vector.broadcast %cst_25 : f32 to vector<8x128xf32>
    %96 = arith.addf %95, %94 : vector<8x128xf32>
    %97 = arith.divf %95, %96 : vector<8x128xf32>
    %98 = vector.extract_strided_slice %90 {offsets = [0, 128], sizes = [8, 128], strides = [1, 1]} : vector<8x384xf32> to vector<8x128xf32>
    %99 = arith.addf %98, %85 : vector<8x128xf32>
    %100 = arith.negf %99 : vector<8x128xf32>
    %101 = math.exp %100 : vector<8x128xf32>
    %cst_26 = arith.constant 1.000000e+00 : f32
    %102 = vector.broadcast %cst_26 : f32 to vector<8x128xf32>
    %103 = arith.addf %102, %101 : vector<8x128xf32>
    %104 = arith.divf %102, %103 : vector<8x128xf32>
    %105 = vector.extract_strided_slice %90 {offsets = [0, 256], sizes = [8, 128], strides = [1, 1]} : vector<8x384xf32> to vector<8x128xf32>
    %106 = vector.broadcast %4 : vector<1x128xf32> to vector<8x128xf32>
    %107 = arith.addf %86, %106 : vector<8x128xf32>
    %108 = arith.mulf %97, %107 : vector<8x128xf32>
    %109 = arith.addf %105, %108 : vector<8x128xf32>
    %110 = math.tanh %109 : vector<8x128xf32>
    %cst_27 = arith.constant 1.000000e+00 : f32
    %111 = vector.broadcast %cst_27 : f32 to vector<8x128xf32>
    %112 = arith.subf %111, %104 : vector<8x128xf32>
    %113 = arith.mulf %112, %110 : vector<8x128xf32>
    %114 = arith.mulf %104, %77 : vector<8x128xf32>
    %115 = arith.addf %113, %114 : vector<8x128xf32>
    %116 = arith.index_cast %c2_i32 : i32 to index
    %c0_28 = arith.constant 0 : index
    %c0_29 = arith.constant 0 : index
    %117 = vector.load %arg6[%116, %c0_28, %c0_29] : memref<8x8x128xf32, #tpu.memory_space<vmem>>, vector<1x8x128xf32>
    %118 = vector.shape_cast %117 : vector<1x8x128xf32> to vector<8x128xf32>
    %119 = vector.shape_cast %115 : vector<8x128xf32> to vector<1x8x128xf32>
    tpu.vector_store %arg6[%116, %c0_28, %c0_29], %119 {strides = array<i32>} : memref<8x8x128xf32, #tpu.memory_space<vmem>>, vector<1x8x128xf32>,
    %c3_i32 = arith.constant 3 : i32
    %120 = arith.truncf %115 : vector<8x128xf32> to vector<8x128xbf16>
    %cst_30 = arith.constant dense<0.000000e+00> : vector<8x384xf32>
    %121 = tpu.matmul %120, %3, %cst_30 {dimension_numbers = #tpu.dot_dimension_numbers<[1], [0], [0], [1], [0, 0, 1, 1], [], []>} : vector<8x128xbf16>, vector<128x384xbf16>, vector<8x384xf32> -> vector<8x384xf32>
    %122 = vector.extract_strided_slice %121 {offsets = [0, 0], sizes = [8, 128], strides = [1, 1]} : vector<8x384xf32> to vector<8x128xf32>
    %123 = vector.extract_strided_slice %121 {offsets = [0, 128], sizes = [8, 128], strides = [1, 1]} : vector<8x384xf32> to vector<8x128xf32>
    %124 = vector.extract_strided_slice %121 {offsets = [0, 256], sizes = [8, 128], strides = [1, 1]} : vector<8x384xf32> to vector<8x128xf32>
    %125 = arith.index_cast %c3_i32 : i32 to index
    %c0_31 = arith.constant 0 : index
    %c0_32 = arith.constant 0 : index
    %126 = vector.load %arg3[%125, %c0_31, %c0_32] : memref<8x8x384xbf16, #tpu.memory_space<vmem>>, vector<1x8x384xbf16>
    %127 = vector.shape_cast %126 : vector<1x8x384xbf16> to vector<8x384xbf16>
    %128 = arith.extf %127 : vector<8x384xbf16> to vector<8x384xf32>
    %129 = vector.extract_strided_slice %128 {offsets = [0, 0], sizes = [8, 128], strides = [1, 1]} : vector<8x384xf32> to vector<8x128xf32>
    %130 = arith.addf %129, %122 : vector<8x128xf32>
    %131 = arith.negf %130 : vector<8x128xf32>
    %132 = math.exp %131 : vector<8x128xf32>
    %cst_33 = arith.constant 1.000000e+00 : f32
    %133 = vector.broadcast %cst_33 : f32 to vector<8x128xf32>
    %134 = arith.addf %133, %132 : vector<8x128xf32>
    %135 = arith.divf %133, %134 : vector<8x128xf32>
    %136 = vector.extract_strided_slice %128 {offsets = [0, 128], sizes = [8, 128], strides = [1, 1]} : vector<8x384xf32> to vector<8x128xf32>
    %137 = arith.addf %136, %123 : vector<8x128xf32>
    %138 = arith.negf %137 : vector<8x128xf32>
    %139 = math.exp %138 : vector<8x128xf32>
    %cst_34 = arith.constant 1.000000e+00 : f32
    %140 = vector.broadcast %cst_34 : f32 to vector<8x128xf32>
    %141 = arith.addf %140, %139 : vector<8x128xf32>
    %142 = arith.divf %140, %141 : vector<8x128xf32>
    %143 = vector.extract_strided_slice %128 {offsets = [0, 256], sizes = [8, 128], strides = [1, 1]} : vector<8x384xf32> to vector<8x128xf32>
    %144 = vector.broadcast %4 : vector<1x128xf32> to vector<8x128xf32>
    %145 = arith.addf %124, %144 : vector<8x128xf32>
    %146 = arith.mulf %135, %145 : vector<8x128xf32>
    %147 = arith.addf %143, %146 : vector<8x128xf32>
    %148 = math.tanh %147 : vector<8x128xf32>
    %cst_35 = arith.constant 1.000000e+00 : f32
    %149 = vector.broadcast %cst_35 : f32 to vector<8x128xf32>
    %150 = arith.subf %149, %142 : vector<8x128xf32>
    %151 = arith.mulf %150, %148 : vector<8x128xf32>
    %152 = arith.mulf %142, %115 : vector<8x128xf32>
    %153 = arith.addf %151, %152 : vector<8x128xf32>
    %154 = arith.index_cast %c3_i32 : i32 to index
    %c0_36 = arith.constant 0 : index
    %c0_37 = arith.constant 0 : index
    %155 = vector.load %arg6[%154, %c0_36, %c0_37] : memref<8x8x128xf32, #tpu.memory_space<vmem>>, vector<1x8x128xf32>
    %156 = vector.shape_cast %155 : vector<1x8x128xf32> to vector<8x128xf32>
    %157 = vector.shape_cast %153 : vector<8x128xf32> to vector<1x8x128xf32>
    tpu.vector_store %arg6[%154, %c0_36, %c0_37], %157 {strides = array<i32>} : memref<8x8x128xf32, #tpu.memory_space<vmem>>, vector<1x8x128xf32>,
    %c4_i32 = arith.constant 4 : i32
    %158 = arith.truncf %153 : vector<8x128xf32> to vector<8x128xbf16>
    %cst_38 = arith.constant dense<0.000000e+00> : vector<8x384xf32>
    %159 = tpu.matmul %158, %3, %cst_38 {dimension_numbers = #tpu.dot_dimension_numbers<[1], [0], [0], [1], [0, 0, 1, 1], [], []>} : vector<8x128xbf16>, vector<128x384xbf16>, vector<8x384xf32> -> vector<8x384xf32>
    %160 = vector.extract_strided_slice %159 {offsets = [0, 0], sizes = [8, 128], strides = [1, 1]} : vector<8x384xf32> to vector<8x128xf32>
    %161 = vector.extract_strided_slice %159 {offsets = [0, 128], sizes = [8, 128], strides = [1, 1]} : vector<8x384xf32> to vector<8x128xf32>
    %162 = vector.extract_strided_slice %159 {offsets = [0, 256], sizes = [8, 128], strides = [1, 1]} : vector<8x384xf32> to vector<8x128xf32>
    %163 = arith.index_cast %c4_i32 : i32 to index
    %c0_39 = arith.constant 0 : index
    %c0_40 = arith.constant 0 : index
    %164 = vector.load %arg3[%163, %c0_39, %c0_40] : memref<8x8x384xbf16, #tpu.memory_space<vmem>>, vector<1x8x384xbf16>
    %165 = vector.shape_cast %164 : vector<1x8x384xbf16> to vector<8x384xbf16>
    %166 = arith.extf %165 : vector<8x384xbf16> to vector<8x384xf32>
    %167 = vector.extract_strided_slice %166 {offsets = [0, 0], sizes = [8, 128], strides = [1, 1]} : vector<8x384xf32> to vector<8x128xf32>
    %168 = arith.addf %167, %160 : vector<8x128xf32>
    %169 = arith.negf %168 : vector<8x128xf32>
    %170 = math.exp %169 : vector<8x128xf32>
    %cst_41 = arith.constant 1.000000e+00 : f32
    %171 = vector.broadcast %cst_41 : f32 to vector<8x128xf32>
    %172 = arith.addf %171, %170 : vector<8x128xf32>
    %173 = arith.divf %171, %172 : vector<8x128xf32>
    %174 = vector.extract_strided_slice %166 {offsets = [0, 128], sizes = [8, 128], strides = [1, 1]} : vector<8x384xf32> to vector<8x128xf32>
    %175 = arith.addf %174, %161 : vector<8x128xf32>
    %176 = arith.negf %175 : vector<8x128xf32>
    %177 = math.exp %176 : vector<8x128xf32>
    %cst_42 = arith.constant 1.000000e+00 : f32
    %178 = vector.broadcast %cst_42 : f32 to vector<8x128xf32>
    %179 = arith.addf %178, %177 : vector<8x128xf32>
    %180 = arith.divf %178, %179 : vector<8x128xf32>
    %181 = vector.extract_strided_slice %166 {offsets = [0, 256], sizes = [8, 128], strides = [1, 1]} : vector<8x384xf32> to vector<8x128xf32>
    %182 = vector.broadcast %4 : vector<1x128xf32> to vector<8x128xf32>
    %183 = arith.addf %162, %182 : vector<8x128xf32>
    %184 = arith.mulf %173, %183 : vector<8x128xf32>
    %185 = arith.addf %181, %184 : vector<8x128xf32>
    %186 = math.tanh %185 : vector<8x128xf32>
    %cst_43 = arith.constant 1.000000e+00 : f32
    %187 = vector.broadcast %cst_43 : f32 to vector<8x128xf32>
    %188 = arith.subf %187, %180 : vector<8x128xf32>
    %189 = arith.mulf %188, %186 : vector<8x128xf32>
    %190 = arith.mulf %180, %153 : vector<8x128xf32>
    %191 = arith.addf %189, %190 : vector<8x128xf32>
    %192 = arith.index_cast %c4_i32 : i32 to index
    %c0_44 = arith.constant 0 : index
    %c0_45 = arith.constant 0 : index
    %193 = vector.load %arg6[%192, %c0_44, %c0_45] : memref<8x8x128xf32, #tpu.memory_space<vmem>>, vector<1x8x128xf32>
    %194 = vector.shape_cast %193 : vector<1x8x128xf32> to vector<8x128xf32>
    %195 = vector.shape_cast %191 : vector<8x128xf32> to vector<1x8x128xf32>
    tpu.vector_store %arg6[%192, %c0_44, %c0_45], %195 {strides = array<i32>} : memref<8x8x128xf32, #tpu.memory_space<vmem>>, vector<1x8x128xf32>,
    %c5_i32 = arith.constant 5 : i32
    %196 = arith.truncf %191 : vector<8x128xf32> to vector<8x128xbf16>
    %cst_46 = arith.constant dense<0.000000e+00> : vector<8x384xf32>
    %197 = tpu.matmul %196, %3, %cst_46 {dimension_numbers = #tpu.dot_dimension_numbers<[1], [0], [0], [1], [0, 0, 1, 1], [], []>} : vector<8x128xbf16>, vector<128x384xbf16>, vector<8x384xf32> -> vector<8x384xf32>
    %198 = vector.extract_strided_slice %197 {offsets = [0, 0], sizes = [8, 128], strides = [1, 1]} : vector<8x384xf32> to vector<8x128xf32>
    %199 = vector.extract_strided_slice %197 {offsets = [0, 128], sizes = [8, 128], strides = [1, 1]} : vector<8x384xf32> to vector<8x128xf32>
    %200 = vector.extract_strided_slice %197 {offsets = [0, 256], sizes = [8, 128], strides = [1, 1]} : vector<8x384xf32> to vector<8x128xf32>
    %201 = arith.index_cast %c5_i32 : i32 to index
    %c0_47 = arith.constant 0 : index
    %c0_48 = arith.constant 0 : index
    %202 = vector.load %arg3[%201, %c0_47, %c0_48] : memref<8x8x384xbf16, #tpu.memory_space<vmem>>, vector<1x8x384xbf16>
    %203 = vector.shape_cast %202 : vector<1x8x384xbf16> to vector<8x384xbf16>
    %204 = arith.extf %203 : vector<8x384xbf16> to vector<8x384xf32>
    %205 = vector.extract_strided_slice %204 {offsets = [0, 0], sizes = [8, 128], strides = [1, 1]} : vector<8x384xf32> to vector<8x128xf32>
    %206 = arith.addf %205, %198 : vector<8x128xf32>
    %207 = arith.negf %206 : vector<8x128xf32>
    %208 = math.exp %207 : vector<8x128xf32>
    %cst_49 = arith.constant 1.000000e+00 : f32
    %209 = vector.broadcast %cst_49 : f32 to vector<8x128xf32>
    %210 = arith.addf %209, %208 : vector<8x128xf32>
    %211 = arith.divf %209, %210 : vector<8x128xf32>
    %212 = vector.extract_strided_slice %204 {offsets = [0, 128], sizes = [8, 128], strides = [1, 1]} : vector<8x384xf32> to vector<8x128xf32>
    %213 = arith.addf %212, %199 : vector<8x128xf32>
    %214 = arith.negf %213 : vector<8x128xf32>
    %215 = math.exp %214 : vector<8x128xf32>
    %cst_50 = arith.constant 1.000000e+00 : f32
    %216 = vector.broadcast %cst_50 : f32 to vector<8x128xf32>
    %217 = arith.addf %216, %215 : vector<8x128xf32>
    %218 = arith.divf %216, %217 : vector<8x128xf32>
    %219 = vector.extract_strided_slice %204 {offsets = [0, 256], sizes = [8, 128], strides = [1, 1]} : vector<8x384xf32> to vector<8x128xf32>
    %220 = vector.broadcast %4 : vector<1x128xf32> to vector<8x128xf32>
    %221 = arith.addf %200, %220 : vector<8x128xf32>
    %222 = arith.mulf %211, %221 : vector<8x128xf32>
    %223 = arith.addf %219, %222 : vector<8x128xf32>
    %224 = math.tanh %223 : vector<8x128xf32>
    %cst_51 = arith.constant 1.000000e+00 : f32
    %225 = vector.broadcast %cst_51 : f32 to vector<8x128xf32>
    %226 = arith.subf %225, %218 : vector<8x128xf32>
    %227 = arith.mulf %226, %224 : vector<8x128xf32>
    %228 = arith.mulf %218, %191 : vector<8x128xf32>
    %229 = arith.addf %227, %228 : vector<8x128xf32>
    %230 = arith.index_cast %c5_i32 : i32 to index
    %c0_52 = arith.constant 0 : index
    %c0_53 = arith.constant 0 : index
    %231 = vector.load %arg6[%230, %c0_52, %c0_53] : memref<8x8x128xf32, #tpu.memory_space<vmem>>, vector<1x8x128xf32>
    %232 = vector.shape_cast %231 : vector<1x8x128xf32> to vector<8x128xf32>
    %233 = vector.shape_cast %229 : vector<8x128xf32> to vector<1x8x128xf32>
    tpu.vector_store %arg6[%230, %c0_52, %c0_53], %233 {strides = array<i32>} : memref<8x8x128xf32, #tpu.memory_space<vmem>>, vector<1x8x128xf32>,
    %c6_i32 = arith.constant 6 : i32
    %234 = arith.truncf %229 : vector<8x128xf32> to vector<8x128xbf16>
    %cst_54 = arith.constant dense<0.000000e+00> : vector<8x384xf32>
    %235 = tpu.matmul %234, %3, %cst_54 {dimension_numbers = #tpu.dot_dimension_numbers<[1], [0], [0], [1], [0, 0, 1, 1], [], []>} : vector<8x128xbf16>, vector<128x384xbf16>, vector<8x384xf32> -> vector<8x384xf32>
    %236 = vector.extract_strided_slice %235 {offsets = [0, 0], sizes = [8, 128], strides = [1, 1]} : vector<8x384xf32> to vector<8x128xf32>
    %237 = vector.extract_strided_slice %235 {offsets = [0, 128], sizes = [8, 128], strides = [1, 1]} : vector<8x384xf32> to vector<8x128xf32>
    %238 = vector.extract_strided_slice %235 {offsets = [0, 256], sizes = [8, 128], strides = [1, 1]} : vector<8x384xf32> to vector<8x128xf32>
    %239 = arith.index_cast %c6_i32 : i32 to index
    %c0_55 = arith.constant 0 : index
    %c0_56 = arith.constant 0 : index
    %240 = vector.load %arg3[%239, %c0_55, %c0_56] : memref<8x8x384xbf16, #tpu.memory_space<vmem>>, vector<1x8x384xbf16>
    %241 = vector.shape_cast %240 : vector<1x8x384xbf16> to vector<8x384xbf16>
    %242 = arith.extf %241 : vector<8x384xbf16> to vector<8x384xf32>
    %243 = vector.extract_strided_slice %242 {offsets = [0, 0], sizes = [8, 128], strides = [1, 1]} : vector<8x384xf32> to vector<8x128xf32>
    %244 = arith.addf %243, %236 : vector<8x128xf32>
    %245 = arith.negf %244 : vector<8x128xf32>
    %246 = math.exp %245 : vector<8x128xf32>
    %cst_57 = arith.constant 1.000000e+00 : f32
    %247 = vector.broadcast %cst_57 : f32 to vector<8x128xf32>
    %248 = arith.addf %247, %246 : vector<8x128xf32>
    %249 = arith.divf %247, %248 : vector<8x128xf32>
    %250 = vector.extract_strided_slice %242 {offsets = [0, 128], sizes = [8, 128], strides = [1, 1]} : vector<8x384xf32> to vector<8x128xf32>
    %251 = arith.addf %250, %237 : vector<8x128xf32>
    %252 = arith.negf %251 : vector<8x128xf32>
    %253 = math.exp %252 : vector<8x128xf32>
    %cst_58 = arith.constant 1.000000e+00 : f32
    %254 = vector.broadcast %cst_58 : f32 to vector<8x128xf32>
    %255 = arith.addf %254, %253 : vector<8x128xf32>
    %256 = arith.divf %254, %255 : vector<8x128xf32>
    %257 = vector.extract_strided_slice %242 {offsets = [0, 256], sizes = [8, 128], strides = [1, 1]} : vector<8x384xf32> to vector<8x128xf32>
    %258 = vector.broadcast %4 : vector<1x128xf32> to vector<8x128xf32>
    %259 = arith.addf %238, %258 : vector<8x128xf32>
    %260 = arith.mulf %249, %259 : vector<8x128xf32>
    %261 = arith.addf %257, %260 : vector<8x128xf32>
    %262 = math.tanh %261 : vector<8x128xf32>
    %cst_59 = arith.constant 1.000000e+00 : f32
    %263 = vector.broadcast %cst_59 : f32 to vector<8x128xf32>
    %264 = arith.subf %263, %256 : vector<8x128xf32>
    %265 = arith.mulf %264, %262 : vector<8x128xf32>
    %266 = arith.mulf %256, %229 : vector<8x128xf32>
    %267 = arith.addf %265, %266 : vector<8x128xf32>
    %268 = arith.index_cast %c6_i32 : i32 to index
    %c0_60 = arith.constant 0 : index
    %c0_61 = arith.constant 0 : index
    %269 = vector.load %arg6[%268, %c0_60, %c0_61] : memref<8x8x128xf32, #tpu.memory_space<vmem>>, vector<1x8x128xf32>
    %270 = vector.shape_cast %269 : vector<1x8x128xf32> to vector<8x128xf32>
    %271 = vector.shape_cast %267 : vector<8x128xf32> to vector<1x8x128xf32>
    tpu.vector_store %arg6[%268, %c0_60, %c0_61], %271 {strides = array<i32>} : memref<8x8x128xf32, #tpu.memory_space<vmem>>, vector<1x8x128xf32>,
    %c7_i32 = arith.constant 7 : i32
    %272 = arith.truncf %267 : vector<8x128xf32> to vector<8x128xbf16>
    %cst_62 = arith.constant dense<0.000000e+00> : vector<8x384xf32>
    %273 = tpu.matmul %272, %3, %cst_62 {dimension_numbers = #tpu.dot_dimension_numbers<[1], [0], [0], [1], [0, 0, 1, 1], [], []>} : vector<8x128xbf16>, vector<128x384xbf16>, vector<8x384xf32> -> vector<8x384xf32>
    %274 = vector.extract_strided_slice %273 {offsets = [0, 0], sizes = [8, 128], strides = [1, 1]} : vector<8x384xf32> to vector<8x128xf32>
    %275 = vector.extract_strided_slice %273 {offsets = [0, 128], sizes = [8, 128], strides = [1, 1]} : vector<8x384xf32> to vector<8x128xf32>
    %276 = vector.extract_strided_slice %273 {offsets = [0, 256], sizes = [8, 128], strides = [1, 1]} : vector<8x384xf32> to vector<8x128xf32>
    %277 = arith.index_cast %c7_i32 : i32 to index
    %c0_63 = arith.constant 0 : index
    %c0_64 = arith.constant 0 : index
    %278 = vector.load %arg3[%277, %c0_63, %c0_64] : memref<8x8x384xbf16, #tpu.memory_space<vmem>>, vector<1x8x384xbf16>
    %279 = vector.shape_cast %278 : vector<1x8x384xbf16> to vector<8x384xbf16>
    %280 = arith.extf %279 : vector<8x384xbf16> to vector<8x384xf32>
    %281 = vector.extract_strided_slice %280 {offsets = [0, 0], sizes = [8, 128], strides = [1, 1]} : vector<8x384xf32> to vector<8x128xf32>
    %282 = arith.addf %281, %274 : vector<8x128xf32>
    %283 = arith.negf %282 : vector<8x128xf32>
    %284 = math.exp %283 : vector<8x128xf32>
    %cst_65 = arith.constant 1.000000e+00 : f32
    %285 = vector.broadcast %cst_65 : f32 to vector<8x128xf32>
    %286 = arith.addf %285, %284 : vector<8x128xf32>
    %287 = arith.divf %285, %286 : vector<8x128xf32>
    %288 = vector.extract_strided_slice %280 {offsets = [0, 128], sizes = [8, 128], strides = [1, 1]} : vector<8x384xf32> to vector<8x128xf32>
    %289 = arith.addf %288, %275 : vector<8x128xf32>
    %290 = arith.negf %289 : vector<8x128xf32>
    %291 = math.exp %290 : vector<8x128xf32>
    %cst_66 = arith.constant 1.000000e+00 : f32
    %292 = vector.broadcast %cst_66 : f32 to vector<8x128xf32>
    %293 = arith.addf %292, %291 : vector<8x128xf32>
    %294 = arith.divf %292, %293 : vector<8x128xf32>
    %295 = vector.extract_strided_slice %280 {offsets = [0, 256], sizes = [8, 128], strides = [1, 1]} : vector<8x384xf32> to vector<8x128xf32>
    %296 = vector.broadcast %4 : vector<1x128xf32> to vector<8x128xf32>
    %297 = arith.addf %276, %296 : vector<8x128xf32>
    %298 = arith.mulf %287, %297 : vector<8x128xf32>
    %299 = arith.addf %295, %298 : vector<8x128xf32>
    %300 = math.tanh %299 : vector<8x128xf32>
    %cst_67 = arith.constant 1.000000e+00 : f32
    %301 = vector.broadcast %cst_67 : f32 to vector<8x128xf32>
    %302 = arith.subf %301, %294 : vector<8x128xf32>
    %303 = arith.mulf %302, %300 : vector<8x128xf32>
    %304 = arith.mulf %294, %267 : vector<8x128xf32>
    %305 = arith.addf %303, %304 : vector<8x128xf32>
    %306 = arith.index_cast %c7_i32 : i32 to index
    %c0_68 = arith.constant 0 : index
    %c0_69 = arith.constant 0 : index
    %307 = vector.load %arg6[%306, %c0_68, %c0_69] : memref<8x8x128xf32, #tpu.memory_space<vmem>>, vector<1x8x128xf32>
    %308 = vector.shape_cast %307 : vector<1x8x128xf32> to vector<8x128xf32>
    %309 = vector.shape_cast %305 : vector<8x128xf32> to vector<1x8x128xf32>
    tpu.vector_store %arg6[%306, %c0_68, %c0_69], %309 {strides = array<i32>} : memref<8x8x128xf32, #tpu.memory_space<vmem>>, vector<1x8x128xf32>,
    %c8_i32 = arith.constant 8 : i32
    %c0_70 = arith.constant 0 : index
    %c0_71 = arith.constant 0 : index
    %310 = vector.load %arg8[%c0_70, %c0_71] : memref<8x128xf32, #tpu.memory_space<vmem>>, vector<8x128xf32>
    tpu.vector_store %arg8[%c0_70, %c0_71], %305 {strides = array<i32>} : memref<8x128xf32, #tpu.memory_space<vmem>>, vector<8x128xf32>,
    %c0_i32_72 = arith.constant 0 : i32
    %311 = arith.cmpi eq, %arg1, %c0_i32_72 : i32
    %312 = arith.extui %311 : i1 to i32
    %c0_i32_73 = arith.constant 0 : i32
    %313 = arith.cmpi ne, %312, %c0_i32_73 : i32
    scf.if %313 {
      %c0_74 = arith.constant 0 : index
      %c0_75 = arith.constant 0 : index
      %314 = vector.load %arg7[%c0_74, %c0_75] : memref<8x128xf32, #tpu.memory_space<vmem>>, vector<8x128xf32>
      tpu.vector_store %arg7[%c0_74, %c0_75], %305 {strides = array<i32>} : memref<8x128xf32, #tpu.memory_space<vmem>>, vector<8x128xf32>,
    } else {
    }
    return
  }
  func.func @transform_0(%arg0: i32, %arg1: i32) -> (i32, i32) {
    %c0_i32 = arith.constant 0 : i32
    %c0_i32_0 = arith.constant 0 : i32
    return %arg0, %c0_i32 : i32, i32
  }
  func.func @transform_1(%arg0: i32, %arg1: i32) -> (i32, i32, i32) {
    %c0_i32 = arith.constant 0 : i32
    %c0_i32_0 = arith.constant 0 : i32
    return %arg1, %arg0, %c0_i32 : i32, i32, i32
  }
  func.func @transform_2(%arg0: i32, %arg1: i32) -> (i32, i32) {
    %c0_i32 = arith.constant 0 : i32
    %c0_i32_0 = arith.constant 0 : i32
    %c0_i32_1 = arith.constant 0 : i32
    return %c0_i32, %c0_i32_0 : i32, i32
  }
  func.func @transform_3(%arg0: i32, %arg1: i32) -> (i32, i32) {
    %c0_i32 = arith.constant 0 : i32
    %c0_i32_0 = arith.constant 0 : i32
    %c0_i32_1 = arith.constant 0 : i32
    return %c0_i32, %c0_i32_0 : i32, i32
  }
  func.func @transform_4(%arg0: i32, %arg1: i32) -> (i32, i32, i32) {
    %c0_i32 = arith.constant 0 : i32
    %c0_i32_0 = arith.constant 0 : i32
    return %arg1, %arg0, %c0_i32 : i32, i32, i32
  }
  func.func @transform_5(%arg0: i32, %arg1: i32) -> (i32, i32) {
    %c0_i32 = arith.constant 0 : i32
    %c0_i32_0 = arith.constant 0 : i32
    return %arg0, %c0_i32 : i32, i32
  }
}

module attributes {stable_mosaic.version = 11 : i64} {
  func.func @_linear_kernel(%arg0: i32, %arg1: i32, %arg2: memref<64x128xf32, #tpu.memory_space<vmem>>, %arg3: memref<128x128xbf16, #tpu.memory_space<vmem>>, %arg4: memref<1x128xf32, #tpu.memory_space<vmem>>, %arg5: memref<64x128xf32, #tpu.memory_space<vmem>>) attributes {dimension_semantics = [#tpu.dimension_semantics<parallel>, #tpu.dimension_semantics<parallel>], iteration_bounds = array<i64: 1, 1>, scalar_prefetch = 0 : i64, scratch_operands = 0 : i64, tpu.core_type = #tpu.core_type<tc>, window_params = [{transform_indices = @transform_0, window_bounds = array<i64: 64, 128>}, {transform_indices = @transform_1, window_bounds = array<i64: 128, 128>}, {transform_indices = @transform_2, window_bounds = array<i64: 1, 128>}, {transform_indices = @transform_3, window_bounds = array<i64: 64, 128>}]} {
    %c0 = arith.constant 0 : index
    %c0_0 = arith.constant 0 : index
    %0 = vector.load %arg2[%c0, %c0_0] : memref<64x128xf32, #tpu.memory_space<vmem>>, vector<64x128xf32>
    %1 = arith.truncf %0 : vector<64x128xf32> to vector<64x128xbf16>
    %c0_1 = arith.constant 0 : index
    %c0_2 = arith.constant 0 : index
    %2 = vector.load %arg3[%c0_1, %c0_2] : memref<128x128xbf16, #tpu.memory_space<vmem>>, vector<128x128xbf16>
    %cst = arith.constant dense<0.000000e+00> : vector<64x128xf32>
    %3 = tpu.matmul %1, %2, %cst {dimension_numbers = #tpu.dot_dimension_numbers<[1], [0], [0], [1], [0, 0, 1, 1], [], []>} : vector<64x128xbf16>, vector<128x128xbf16>, vector<64x128xf32> -> vector<64x128xf32>
    %c0_3 = arith.constant 0 : index
    %c0_4 = arith.constant 0 : index
    %4 = vector.load %arg4[%c0_3, %c0_4] : memref<1x128xf32, #tpu.memory_space<vmem>>, vector<1x128xf32>
    %5 = vector.broadcast %4 : vector<1x128xf32> to vector<64x128xf32>
    %6 = arith.addf %3, %5 : vector<64x128xf32>
    %c0_5 = arith.constant 0 : index
    %c0_6 = arith.constant 0 : index
    %7 = vector.load %arg5[%c0_5, %c0_6] : memref<64x128xf32, #tpu.memory_space<vmem>>, vector<64x128xf32>
    tpu.vector_store %arg5[%c0_5, %c0_6], %6 {strides = array<i32>} : memref<64x128xf32, #tpu.memory_space<vmem>>, vector<64x128xf32>,
    return
  }
  func.func @transform_0(%arg0: i32, %arg1: i32) -> (i32, i32) {
    %c0_i32 = arith.constant 0 : i32
    %c0_i32_0 = arith.constant 0 : i32
    return %arg0, %c0_i32 : i32, i32
  }
  func.func @transform_1(%arg0: i32, %arg1: i32) -> (i32, i32) {
    %c0_i32 = arith.constant 0 : i32
    %c0_i32_0 = arith.constant 0 : i32
    return %c0_i32, %arg1 : i32, i32
  }
  func.func @transform_2(%arg0: i32, %arg1: i32) -> (i32, i32) {
    %c0_i32 = arith.constant 0 : i32
    %c0_i32_0 = arith.constant 0 : i32
    return %c0_i32, %arg1 : i32, i32
  }
  func.func @transform_3(%arg0: i32, %arg1: i32) -> (i32, i32) {
    %c0_i32 = arith.constant 0 : i32
    return %arg0, %arg1 : i32, i32
  }
}

</mosaic_0001>

<llo_original>
// kernel: rnn_forward.7
$region0: #{rnn_forward.7}
  #allocation0 [shape = 'u32[]', space=smem, size = 0x4, offset = 0x4, fixed_abs, tag = 'smem constant byte address 0x4 - core index']
  #allocation1 [shape = 'u32[72,128]{1,0:T(1,128)}', space=vmem, size = 0x9000, scoped, tag = 'internal scratch']
  %s0 = inlined_call_operand.vmem [shape: f32[64,128], index: 0, kind: input, shape index: {}]
  %s1 = inlined_call_operand.vmem [shape: bf16[128,384], index: 1, kind: input, shape index: {}]
  %s2 = inlined_call_operand.vmem [shape: f32[1,384], index: 2, kind: input, shape index: {}]
  %s3 = inlined_call_operand.vmem [shape: bf16[64,384], index: 3, kind: output, shape index: {}]
  %s4 = sld [smem:[#allocation0]]
  $region22: #{rnn_forward.7} parent=0
    _
  %s6 = ssub.s32 1, %s4
  %s7 = scalar_select 0, %s6, %s4
  // Predicated region
  $region2: #{rnn_forward.7} parent=0 // pred_check
    _
  $region3: #{rnn_forward.7} parent=0 // pred_check_branch
    %9 = sbr.rel (0) target = $region5
  $region4: #{rnn_forward.7} parent=0 // pred_region
    _
  $region5: #{rnn_forward.7} parent=0 // pred_fallthru
    _
  // Predicated region
  $region6: #{rnn_forward.7} parent=0 // pred_check
    _
  $region7: #{rnn_forward.7} parent=0 // pred_check_branch
    %11 = sbr.rel (0) target = $region9
  $region8: #{rnn_forward.7} parent=0 // pred_region
    _
  $region9: #{rnn_forward.7} parent=0 // pred_fallthru
    _
  // Predicated region
  $region10: #{rnn_forward.7} parent=0 // pred_check
    _
  $region11: #{rnn_forward.7} parent=0 // pred_check_branch
    %13 = sbr.rel (0) target = $region13
  $region12: #{rnn_forward.7} parent=0 // pred_region
    _
  $region13: #{rnn_forward.7} parent=0 // pred_fallthru
    _
  %v14 = vld [vmem:[%s0] sm:$0xff]
  %v15 = vld [vmem:[%s0 + $0x8] sm:$0xff]
  %v16 = vld [vmem:[%s0 + $0x10] sm:$0xff]
  %v17 = vld [vmem:[%s0 + $0x18] sm:$0xff]
  %v18 = vld [vmem:[%s0 + $0x20] sm:$0xff]
  %v19 = vld [vmem:[%s0 + $0x28] sm:$0xff]
  %v20 = vld [vmem:[%s0 + $0x30] sm:$0xff]
  %v21 = vld [vmem:[%s0 + $0x38] sm:$0xff]
  %v22 = vpack.c.bf16 %v15, %v14
  %v23 = vpack.c.bf16 %v17, %v16
  %v24 = vpack.c.bf16 %v19, %v18
  %v25 = vpack.c.bf16 %v21, %v20
  %v26 = vld [vmem:[%s1] sm:$0xff]
  %v27 = vld [vmem:[%s1 + $0x8] sm:$0xf]
  %v28 = vld [vmem:[%s1 + $0xc] sm:$0xff]
  %v29 = vld [vmem:[%s1 + $0x14] sm:$0xf]
  %v30 = vld [vmem:[%s1 + $0x18] sm:$0xff]
  %v31 = vld [vmem:[%s1 + $0x20] sm:$0xf]
  %v32 = vld [vmem:[%s1 + $0x24] sm:$0xff]
  %v33 = vld [vmem:[%s1 + $0x2c] sm:$0xf]
  %v34 = vld [vmem:[%s1 + $0x30] sm:$0xff]
  %v35 = vld [vmem:[%s1 + $0x38] sm:$0xf]
  %v36 = vld [vmem:[%s1 + $0x3c] sm:$0xff]
  %v37 = vld [vmem:[%s1 + $0x44] sm:$0xf]
  %v38 = vld [vmem:[%s1 + $0x48] sm:$0xff]
  %v39 = vld [vmem:[%s1 + $0x50] sm:$0xf]
  %v40 = vld [vmem:[%s1 + $0x54] sm:$0xff]
  %v41 = vld [vmem:[%s1 + $0x5c] sm:$0xf]
  %v42 = vld [vmem:[%s1 + $0x60] sm:$0xff]
  %v43 = vld [vmem:[%s1 + $0x68] sm:$0xf]
  %v44 = vld [vmem:[%s1 + $0x6c] sm:$0xff]
  %v45 = vld [vmem:[%s1 + $0x74] sm:$0xf]
  %v46 = vld [vmem:[%s1 + $0x78] sm:$0xff]
  %v47 = vld [vmem:[%s1 + $0x80] sm:$0xf]
  %v48 = vld [vmem:[%s1 + $0x84] sm:$0xff]
  %v49 = vld [vmem:[%s1 + $0x8c] sm:$0xf]
  %v50 = vld [vmem:[%s1 + $0x90] sm:$0xff]
  %v51 = vld [vmem:[%s1 + $0x98] sm:$0xf]
  %v52 = vld [vmem:[%s1 + $0x9c] sm:$0xff]
  %v53 = vld [vmem:[%s1 + $0xa4] sm:$0xf]
  %v54 = vld [vmem:[%s1 + $0xa8] sm:$0xff]
  %v55 = vld [vmem:[%s1 + $0xb0] sm:$0xf]
  %v56 = vld [vmem:[%s1 + $0xb4] sm:$0xff]
  %v57 = vld [vmem:[%s1 + $0xbc] sm:$0xf]
  %v58 = vld [vmem:[%s2] sm:$0x7]
  %v60 = vperm.slane %v58, 0
  %v61 = vperm.slane %v58, 1
  %v62 = vperm.slane %v58, 2
  %v98 = vunpack.c.l.b16 %v26
  %v99 = vunpack.c.h.b16 %v26
  %v100 = vunpack.c.l.b16 %v27
  %v101 = vunpack.c.l.b16 %v28
  %v102 = vunpack.c.h.b16 %v28
  %v103 = vunpack.c.l.b16 %v29
  %v104 = vunpack.c.l.b16 %v30
  %v105 = vunpack.c.h.b16 %v30
  %v106 = vunpack.c.l.b16 %v31
  %v107 = vunpack.c.l.b16 %v32
  %v108 = vunpack.c.h.b16 %v32
  %v109 = vunpack.c.l.b16 %v33
  %v110 = vunpack.c.l.b16 %v34
  %v111 = vunpack.c.h.b16 %v34
  %v112 = vunpack.c.l.b16 %v35
  %v113 = vunpack.c.l.b16 %v36
  %v114 = vunpack.c.h.b16 %v36
  %v115 = vunpack.c.l.b16 %v37
  %v116 = vunpack.c.l.b16 %v38
  %v117 = vunpack.c.h.b16 %v38
  %v118 = vunpack.c.l.b16 %v39
  %v119 = vunpack.c.l.b16 %v40
  %v120 = vunpack.c.h.b16 %v40
  %v121 = vunpack.c.l.b16 %v41
  %v122 = vunpack.c.l.b16 %v42
  %v123 = vunpack.c.h.b16 %v42
  %v124 = vunpack.c.l.b16 %v43
  %v125 = vunpack.c.l.b16 %v44
  %v126 = vunpack.c.h.b16 %v44
  %v127 = vunpack.c.l.b16 %v45
  %v128 = vunpack.c.l.b16 %v46
  %v129 = vunpack.c.h.b16 %v46
  %v130 = vunpack.c.l.b16 %v47
  %v131 = vunpack.c.l.b16 %v48
  %v132 = vunpack.c.h.b16 %v48
  %v133 = vunpack.c.l.b16 %v49
  %v134 = vunpack.c.l.b16 %v50
  %v135 = vunpack.c.h.b16 %v50
  %v136 = vunpack.c.l.b16 %v51
  %v137 = vunpack.c.l.b16 %v52
  %v138 = vunpack.c.h.b16 %v52
  %v139 = vunpack.c.l.b16 %v53
  %v140 = vunpack.c.l.b16 %v54
  %v141 = vunpack.c.h.b16 %v54
  %v142 = vunpack.c.l.b16 %v55
  %v143 = vunpack.c.l.b16 %v56
  %v144 = vunpack.c.h.b16 %v56
  %v145 = vunpack.c.l.b16 %v57
  %v146 = vpack.c.b16 %v101, %v98
  %v147 = vpack.c.b16 %v102, %v99
  %v148 = vpack.c.b16 %v103, %v100
  %v149 = vpack.c.b16 %v107, %v104
  %v150 = vpack.c.b16 %v108, %v105
  %v151 = vpack.c.b16 %v109, %v106
  %v152 = vpack.c.b16 %v113, %v110
  %v153 = vpack.c.b16 %v114, %v111
  %v154 = vpack.c.b16 %v115, %v112
  %v155 = vpack.c.b16 %v119, %v116
  %v156 = vpack.c.b16 %v120, %v117
  %v157 = vpack.c.b16 %v121, %v118
  %v158 = vpack.c.b16 %v125, %v122
  %v159 = vpack.c.b16 %v126, %v123
  %v160 = vpack.c.b16 %v127, %v124
  %v161 = vpack.c.b16 %v131, %v128
  %v162 = vpack.c.b16 %v132, %v129
  %v163 = vpack.c.b16 %v133, %v130
  %v164 = vpack.c.b16 %v137, %v134
  %v165 = vpack.c.b16 %v138, %v135
  %v166 = vpack.c.b16 %v139, %v136
  %v167 = vpack.c.b16 %v143, %v140
  %v168 = vpack.c.b16 %v144, %v141
  %v169 = vpack.c.b16 %v145, %v142
  %194 = vmatpush.bf16.msra.mxu0 %v167
  %195 = vmatpush.bf16.msra.mxu0 %v164
  %196 = vmatpush.bf16.msra.mxu0 %v161
  %197 = vmatpush.bf16.msra.mxu0 %v158
  %198 = vmatpush.bf16.msra.mxu0 %v155
  %199 = vmatpush.bf16.msra.mxu0 %v152
  %200 = vmatpush.bf16.msra.mxu0 %v149
  %201 = vmatpush.bf16.msra.mxu0 %v146
  %202 = vmatmul.bf16.gmra.mxu0 %v22
  %v203 = vpop.f32.mrf.mxu0
  %v204 = vadd.f32 %v60, %v203
  %v205 = vpop.f32.mrf.mxu0
  %v206 = vadd.f32 %v60, %v205
  %207 = vmatmul.bf16.gmra.mxu0 %v23
  %v208 = vpop.f32.mrf.mxu0
  %v209 = vadd.f32 %v60, %v208
  %v210 = vpop.f32.mrf.mxu0
  %v211 = vadd.f32 %v60, %v210
  %212 = vmatmul.bf16.gmra.mxu0 %v24
  %v213 = vpop.f32.mrf.mxu0
  %v214 = vadd.f32 %v60, %v213
  %v215 = vpop.f32.mrf.mxu0
  %v216 = vadd.f32 %v60, %v215
  %217 = vmatmul.bf16.gmra.mxu0 %v25
  %v218 = vpop.f32.mrf.mxu0
  %v219 = vadd.f32 %v60, %v218
  %v220 = vpop.f32.mrf.mxu0
  %v221 = vadd.f32 %v60, %v220
  %222 = vdwg.mxu0
  %223 = vmatpush.bf16.msra.mxu0 %v168
  %224 = vmatpush.bf16.msra.mxu0 %v165
  %225 = vmatpush.bf16.msra.mxu0 %v162
  %226 = vmatpush.bf16.msra.mxu0 %v159
  %227 = vmatpush.bf16.msra.mxu0 %v156
  %228 = vmatpush.bf16.msra.mxu0 %v153
  %229 = vmatpush.bf16.msra.mxu0 %v150
  %230 = vmatpush.bf16.msra.mxu0 %v147
  %231 = vmatmul.bf16.gmra.mxu0 %v22
  %v232 = vpop.f32.mrf.mxu0
  %v233 = vadd.f32 %v61, %v232
  %v234 = vpop.f32.mrf.mxu0
  %v235 = vadd.f32 %v61, %v234
  %236 = vmatmul.bf16.gmra.mxu0 %v23
  %v237 = vpop.f32.mrf.mxu0
  %v238 = vadd.f32 %v61, %v237
  %v239 = vpop.f32.mrf.mxu0
  %v240 = vadd.f32 %v61, %v239
  %241 = vmatmul.bf16.gmra.mxu0 %v24
  %v242 = vpop.f32.mrf.mxu0
  %v243 = vadd.f32 %v61, %v242
  %v244 = vpop.f32.mrf.mxu0
  %v245 = vadd.f32 %v61, %v244
  %246 = vmatmul.bf16.gmra.mxu0 %v25
  %v247 = vpop.f32.mrf.mxu0
  %v248 = vadd.f32 %v61, %v247
  %v249 = vpop.f32.mrf.mxu0
  %v250 = vadd.f32 %v61, %v249
  %251 = vdwg.mxu0
  %252 = vmatpush.bf16.msra.mxu0 %v169
  %253 = vmatpush.bf16.msra.mxu0 %v166
  %254 = vmatpush.bf16.msra.mxu0 %v163
  %255 = vmatpush.bf16.msra.mxu0 %v160
  %256 = vmatpush.bf16.msra.mxu0 %v157
  %257 = vmatpush.bf16.msra.mxu0 %v154
  %258 = vmatpush.bf16.msra.mxu0 %v151
  %259 = vmatpush.bf16.msra.mxu0 %v148
  %260 = vmatmul.bf16.gmra.mxu0 %v22
  %v261 = vpop.f32.mrf.mxu0
  %v262 = vadd.f32 %v62, %v261
  %v263 = vpop.f32.mrf.mxu0
  %v264 = vadd.f32 %v62, %v263
  %265 = vmatmul.bf16.gmra.mxu0 %v23
  %v266 = vpop.f32.mrf.mxu0
  %v267 = vadd.f32 %v62, %v266
  %v268 = vpop.f32.mrf.mxu0
  %v269 = vadd.f32 %v62, %v268
  %270 = vmatmul.bf16.gmra.mxu0 %v24
  %v271 = vpop.f32.mrf.mxu0
  %v272 = vadd.f32 %v62, %v271
  %v273 = vpop.f32.mrf.mxu0
  %v274 = vadd.f32 %v62, %v273
  %275 = vmatmul.bf16.gmra.mxu0 %v25
  %v276 = vpop.f32.mrf.mxu0
  %v277 = vadd.f32 %v62, %v276
  %v278 = vpop.f32.mrf.mxu0
  %v279 = vadd.f32 %v62, %v278
  %280 = vdwg.mxu0
  %v281 = vpack.c.bf16 %v233, %v204
  %v282 = vpack.c.bf16 %v262, %v262
  %v283 = vpack.c.bf16 %v235, %v206
  %v284 = vpack.c.bf16 %v264, %v264
  %v285 = vpack.c.bf16 %v238, %v209
  %v286 = vpack.c.bf16 %v267, %v267
  %v287 = vpack.c.bf16 %v240, %v211
  %v288 = vpack.c.bf16 %v269, %v269
  %v289 = vpack.c.bf16 %v243, %v214
  %v290 = vpack.c.bf16 %v272, %v272
  %v291 = vpack.c.bf16 %v245, %v216
  %v292 = vpack.c.bf16 %v274, %v274
  %v293 = vpack.c.bf16 %v248, %v219
  %v294 = vpack.c.bf16 %v277, %v277
  %v295 = vpack.c.bf16 %v250, %v221
  %v296 = vpack.c.bf16 %v279, %v279
  %297 = vst [vmem:[%s3] sm:$0xff] %v281
  %298 = vst [vmem:[%s3 + $0x8] sm:$0xf] %v282
  %299 = vst [vmem:[%s3 + $0xc] sm:$0xff] %v283
  %300 = vst [vmem:[%s3 + $0x14] sm:$0xf] %v284
  %301 = vst [vmem:[%s3 + $0x18] sm:$0xff] %v285
  %302 = vst [vmem:[%s3 + $0x20] sm:$0xf] %v286
  %303 = vst [vmem:[%s3 + $0x24] sm:$0xff] %v287
  %304 = vst [vmem:[%s3 + $0x2c] sm:$0xf] %v288
  %305 = vst [vmem:[%s3 + $0x30] sm:$0xff] %v289
  %306 = vst [vmem:[%s3 + $0x38] sm:$0xf] %v290
  %307 = vst [vmem:[%s3 + $0x3c] sm:$0xff] %v291
  %308 = vst [vmem:[%s3 + $0x44] sm:$0xf] %v292
  %309 = vst [vmem:[%s3 + $0x48] sm:$0xff] %v293
  %310 = vst [vmem:[%s3 + $0x50] sm:$0xf] %v294
  %311 = vst [vmem:[%s3 + $0x54] sm:$0xff] %v295
  %312 = vst [vmem:[%s3 + $0x5c] sm:$0xf] %v296
  // Predicated region
  $region14: #{rnn_forward.7} parent=0 // pred_check
    _
  $region15: #{rnn_forward.7} parent=0 // pred_check_branch
    %314 = sbr.rel (0) target = $region17
  $region16: #{rnn_forward.7} parent=0 // pred_region
    _
  $region17: #{rnn_forward.7} parent=0 // pred_fallthru
    _
  // Predicated region
  $region18: #{rnn_forward.7} parent=0 // pred_check
    _
  $region19: #{rnn_forward.7} parent=0 // pred_check_branch
    %316 = sbr.rel (0) target = $region21
  $region20: #{rnn_forward.7} parent=0 // pred_region
    _
  $region21: #{rnn_forward.7} parent=0 // pred_fallthru
    _

// kernel: rnn_forward.13
$region0: #{rnn_forward.13}
  #allocation0 [shape = 'u32[]', space=smem, size = 0x4, offset = 0x4, fixed_abs, tag = 'smem constant byte address 0x4 - core index']
  #allocation1 [shape = 'u32[72,128]{1,0:T(1,128)}', space=vmem, size = 0x9000, scoped, tag = 'internal scratch']
  %s0 = inlined_call_operand.vmem [shape: f32[64,128], index: 0, kind: input, shape index: {}]
  %s1 = inlined_call_operand.vmem [shape: bf16[128,128], index: 1, kind: input, shape index: {}]
  %s2 = inlined_call_operand.vmem [shape: f32[1,128], index: 2, kind: input, shape index: {}]
  %s3 = inlined_call_operand.vmem [shape: f32[64,128], index: 3, kind: output, shape index: {}]
  %s4 = sld [smem:[#allocation0]]
  $region22: #{rnn_forward.13} parent=0
    _
  %s6 = ssub.s32 1, %s4
  %s7 = scalar_select 0, %s6, %s4
  // Predicated region
  $region2: #{rnn_forward.13} parent=0 // pred_check
    _
  $region3: #{rnn_forward.13} parent=0 // pred_check_branch
    %9 = sbr.rel (0) target = $region5
  $region4: #{rnn_forward.13} parent=0 // pred_region
    _
  $region5: #{rnn_forward.13} parent=0 // pred_fallthru
    _
  // Predicated region
  $region6: #{rnn_forward.13} parent=0 // pred_check
    _
  $region7: #{rnn_forward.13} parent=0 // pred_check_branch
    %11 = sbr.rel (0) target = $region9
  $region8: #{rnn_forward.13} parent=0 // pred_region
    _
  $region9: #{rnn_forward.13} parent=0 // pred_fallthru
    _
  // Predicated region
  $region10: #{rnn_forward.13} parent=0 // pred_check
    _
  $region11: #{rnn_forward.13} parent=0 // pred_check_branch
    %13 = sbr.rel (0) target = $region13
  $region12: #{rnn_forward.13} parent=0 // pred_region
    _
  $region13: #{rnn_forward.13} parent=0 // pred_fallthru
    _
  %v14 = vld [vmem:[%s0] sm:$0xff]
  %v15 = vld [vmem:[%s0 + $0x8] sm:$0xff]
  %v16 = vld [vmem:[%s0 + $0x10] sm:$0xff]
  %v17 = vld [vmem:[%s0 + $0x18] sm:$0xff]
  %v18 = vld [vmem:[%s0 + $0x20] sm:$0xff]
  %v19 = vld [vmem:[%s0 + $0x28] sm:$0xff]
  %v20 = vld [vmem:[%s0 + $0x30] sm:$0xff]
  %v21 = vld [vmem:[%s0 + $0x38] sm:$0xff]
  %v22 = vpack.c.bf16 %v15, %v14
  %v23 = vpack.c.bf16 %v17, %v16
  %v24 = vpack.c.bf16 %v19, %v18
  %v25 = vpack.c.bf16 %v21, %v20
  %v26 = vld [vmem:[%s1] sm:$0xf]
  %v27 = vld [vmem:[%s1 + $0x4] sm:$0xf]
  %v28 = vld [vmem:[%s1 + $0x8] sm:$0xf]
  %v29 = vld [vmem:[%s1 + $0xc] sm:$0xf]
  %v30 = vld [vmem:[%s1 + $0x10] sm:$0xf]
  %v31 = vld [vmem:[%s1 + $0x14] sm:$0xf]
  %v32 = vld [vmem:[%s1 + $0x18] sm:$0xf]
  %v33 = vld [vmem:[%s1 + $0x1c] sm:$0xf]
  %v34 = vld [vmem:[%s1 + $0x20] sm:$0xf]
  %v35 = vld [vmem:[%s1 + $0x24] sm:$0xf]
  %v36 = vld [vmem:[%s1 + $0x28] sm:$0xf]
  %v37 = vld [vmem:[%s1 + $0x2c] sm:$0xf]
  %v38 = vld [vmem:[%s1 + $0x30] sm:$0xf]
  %v39 = vld [vmem:[%s1 + $0x34] sm:$0xf]
  %v40 = vld [vmem:[%s1 + $0x38] sm:$0xf]
  %v41 = vld [vmem:[%s1 + $0x3c] sm:$0xf]
  %v42 = vld [vmem:[%s2] sm:$0x1]
  %v44 = vperm.slane %v42, 0
  %v62 = vunpack.c.l.b16 %v26
  %v63 = vunpack.c.l.b16 %v27
  %v64 = vunpack.c.l.b16 %v28
  %v65 = vunpack.c.l.b16 %v29
  %v66 = vunpack.c.l.b16 %v30
  %v67 = vunpack.c.l.b16 %v31
  %v68 = vunpack.c.l.b16 %v32
  %v69 = vunpack.c.l.b16 %v33
  %v70 = vunpack.c.l.b16 %v34
  %v71 = vunpack.c.l.b16 %v35
  %v72 = vunpack.c.l.b16 %v36
  %v73 = vunpack.c.l.b16 %v37
  %v74 = vunpack.c.l.b16 %v38
  %v75 = vunpack.c.l.b16 %v39
  %v76 = vunpack.c.l.b16 %v40
  %v77 = vunpack.c.l.b16 %v41
  %v78 = vpack.c.b16 %v63, %v62
  %v79 = vpack.c.b16 %v65, %v64
  %v80 = vpack.c.b16 %v67, %v66
  %v81 = vpack.c.b16 %v69, %v68
  %v82 = vpack.c.b16 %v71, %v70
  %v83 = vpack.c.b16 %v73, %v72
  %v84 = vpack.c.b16 %v75, %v74
  %v85 = vpack.c.b16 %v77, %v76
  %94 = vmatpush.bf16.msra.mxu0 %v85
  %95 = vmatpush.bf16.msra.mxu0 %v84
  %96 = vmatpush.bf16.msra.mxu0 %v83
  %97 = vmatpush.bf16.msra.mxu0 %v82
  %98 = vmatpush.bf16.msra.mxu0 %v81
  %99 = vmatpush.bf16.msra.mxu0 %v80
  %100 = vmatpush.bf16.msra.mxu0 %v79
  %101 = vmatpush.bf16.msra.mxu0 %v78
  %102 = vmatmul.bf16.gmra.mxu0 %v22
  %v103 = vpop.f32.mrf.mxu0
  %v104 = vadd.f32 %v44, %v103
  %v105 = vpop.f32.mrf.mxu0
  %v106 = vadd.f32 %v44, %v105
  %107 = vmatmul.bf16.gmra.mxu0 %v23
  %v108 = vpop.f32.mrf.mxu0
  %v109 = vadd.f32 %v44, %v108
  %v110 = vpop.f32.mrf.mxu0
  %v111 = vadd.f32 %v44, %v110
  %112 = vmatmul.bf16.gmra.mxu0 %v24
  %v113 = vpop.f32.mrf.mxu0
  %v114 = vadd.f32 %v44, %v113
  %v115 = vpop.f32.mrf.mxu0
  %v116 = vadd.f32 %v44, %v115
  %117 = vmatmul.bf16.gmra.mxu0 %v25
  %v118 = vpop.f32.mrf.mxu0
  %v119 = vadd.f32 %v44, %v118
  %v120 = vpop.f32.mrf.mxu0
  %v121 = vadd.f32 %v44, %v120
  %122 = vdwg.mxu0
  %123 = vst [vmem:[%s3] sm:$0xff] %v104
  %124 = vst [vmem:[%s3 + $0x8] sm:$0xff] %v106
  %125 = vst [vmem:[%s3 + $0x10] sm:$0xff] %v109
  %126 = vst [vmem:[%s3 + $0x18] sm:$0xff] %v111
  %127 = vst [vmem:[%s3 + $0x20] sm:$0xff] %v114
  %128 = vst [vmem:[%s3 + $0x28] sm:$0xff] %v116
  %129 = vst [vmem:[%s3 + $0x30] sm:$0xff] %v119
  %130 = vst [vmem:[%s3 + $0x38] sm:$0xff] %v121
  // Predicated region
  $region14: #{rnn_forward.13} parent=0 // pred_check
    _
  $region15: #{rnn_forward.13} parent=0 // pred_check_branch
    %132 = sbr.rel (0) target = $region17
  $region16: #{rnn_forward.13} parent=0 // pred_region
    _
  $region17: #{rnn_forward.13} parent=0 // pred_fallthru
    _
  // Predicated region
  $region18: #{rnn_forward.13} parent=0 // pred_check
    _
  $region19: #{rnn_forward.13} parent=0 // pred_check_branch
    %134 = sbr.rel (0) target = $region21
  $region20: #{rnn_forward.13} parent=0 // pred_region
    _
  $region21: #{rnn_forward.13} parent=0 // pred_fallthru
    _

// kernel: rnn_forward.8
$region0: #{rnn_forward.8}
  #allocation0 [shape = 'u32[]', space=smem, size = 0x4, offset = 0x4, fixed_abs, tag = 'smem constant byte address 0x4 - core index']
  #allocation1 [shape = 'u32[72,128]{1,0:T(1,128)}', space=vmem, size = 0x9000, scoped, tag = 'internal scratch']
  #allocation2 [shape = 'f32[8,128]{1,0:T(8,128)}', space=vmem, size = 0x1000, scoped, tag = 'scratch operand']
  %s0 = inlined_call_operand.vmem [shape: f32[8,128], index: 0, kind: input, shape index: {}]
  %s1 = inlined_call_operand.vmem [shape: bf16[8,8,384], index: 1, kind: input, shape index: {}]
  %s2 = inlined_call_operand.vmem [shape: bf16[128,384], index: 2, kind: input, shape index: {}]
  %s3 = inlined_call_operand.vmem [shape: f32[1,128], index: 3, kind: input, shape index: {}]
  %s4 = inlined_call_operand.vmem [shape: f32[8,8,128], index: 4, kind: output, shape index: {0}]
  %s5 = inlined_call_operand.vmem [shape: f32[8,128], index: 5, kind: output, shape index: {1}]
  %6 = xla_tuple %s4, %s5
  %s7 = sld [smem:[#allocation0]]
  $region42: #{rnn_forward.8} parent=0
    _
  %s9 = ssub.s32 1, %s7
  %s10 = scalar_select 0, %s9, %s7
  // Predicated region
  $region2: #{rnn_forward.8} parent=0 // pred_check
    _
  $region3: #{rnn_forward.8} parent=0 // pred_check_branch
    %12 = sbr.rel (0) target = $region5
  $region4: #{rnn_forward.8} parent=0 // pred_region
    _
  $region5: #{rnn_forward.8} parent=0 // pred_fallthru
    _
  // Predicated region
  $region6: #{rnn_forward.8} parent=0 // pred_check
    _
  $region7: #{rnn_forward.8} parent=0 // pred_check_branch
    %14 = sbr.rel (0) target = $region9
  $region8: #{rnn_forward.8} parent=0 // pred_region
    _
  $region9: #{rnn_forward.8} parent=0 // pred_fallthru
    _
  // Predicated region
  $region10: #{rnn_forward.8} parent=0 // pred_check
    _
  $region11: #{rnn_forward.8} parent=0 // pred_check_branch
    %16 = sbr.rel (0) target = $region13
  $region12: #{rnn_forward.8} parent=0 // pred_region
    _
  $region13: #{rnn_forward.8} parent=0 // pred_fallthru
    _
  // Predicated region
  $region14: #{rnn_forward.8} parent=0 // pred_check
    _
  $region15: #{rnn_forward.8} parent=0 // pred_check_branch
    %18 = sbr.rel (0) target = $region17
  $region16: #{rnn_forward.8} parent=0 // pred_region
    _
  $region17: #{rnn_forward.8} parent=0 // pred_fallthru
    _
  %p19 = scmp.eq.s32.totalorder 0, 0
  // Predicated region
  $region18: #{rnn_forward.8} parent=0 // pred_check
    %p20 = pneg %p19
  $region19: #{rnn_forward.8} parent=0 // pred_check_branch
    %22 = sbr.rel (%p20) target = $region21
  $region20: #{rnn_forward.8} parent=0 // pred_region
    %v23 = vld [vmem:[%s0] sm:$0xff]
    %24 = vst [vmem:[#allocation2] sm:$0xff] %v23
  $region21: #{rnn_forward.8} parent=0 // pred_fallthru
    _
  %v25 = vld [vmem:[%s2] sm:$0xff]
  %v26 = vld [vmem:[%s2 + $0x8] sm:$0xf]
  %v27 = vld [vmem:[%s2 + $0xc] sm:$0xff]
  %v28 = vld [vmem:[%s2 + $0x14] sm:$0xf]
  %v29 = vld [vmem:[%s2 + $0x18] sm:$0xff]
  %v30 = vld [vmem:[%s2 + $0x20] sm:$0xf]
  %v31 = vld [vmem:[%s2 + $0x24] sm:$0xff]
  %v32 = vld [vmem:[%s2 + $0x2c] sm:$0xf]
  %v33 = vld [vmem:[%s2 + $0x30] sm:$0xff]
  %v34 = vld [vmem:[%s2 + $0x38] sm:$0xf]
  %v35 = vld [vmem:[%s2 + $0x3c] sm:$0xff]
  %v36 = vld [vmem:[%s2 + $0x44] sm:$0xf]
  %v37 = vld [vmem:[%s2 + $0x48] sm:$0xff]
  %v38 = vld [vmem:[%s2 + $0x50] sm:$0xf]
  %v39 = vld [vmem:[%s2 + $0x54] sm:$0xff]
  %v40 = vld [vmem:[%s2 + $0x5c] sm:$0xf]
  %v41 = vld [vmem:[%s2 + $0x60] sm:$0xff]
  %v42 = vld [vmem:[%s2 + $0x68] sm:$0xf]
  %v43 = vld [vmem:[%s2 + $0x6c] sm:$0xff]
  %v44 = vld [vmem:[%s2 + $0x74] sm:$0xf]
  %v45 = vld [vmem:[%s2 + $0x78] sm:$0xff]
  %v46 = vld [vmem:[%s2 + $0x80] sm:$0xf]
  %v47 = vld [vmem:[%s2 + $0x84] sm:$0xff]
  %v48 = vld [vmem:[%s2 + $0x8c] sm:$0xf]
  %v49 = vld [vmem:[%s2 + $0x90] sm:$0xff]
  %v50 = vld [vmem:[%s2 + $0x98] sm:$0xf]
  %v51 = vld [vmem:[%s2 + $0x9c] sm:$0xff]
  %v52 = vld [vmem:[%s2 + $0xa4] sm:$0xf]
  %v53 = vld [vmem:[%s2 + $0xa8] sm:$0xff]
  %v54 = vld [vmem:[%s2 + $0xb0] sm:$0xf]
  %v55 = vld [vmem:[%s2 + $0xb4] sm:$0xff]
  %v56 = vld [vmem:[%s2 + $0xbc] sm:$0xf]
  %v57 = vld [vmem:[%s3] sm:$0x1]
  %v58 = vld [vmem:[#allocation2] sm:$0xff]
  %v59 = vpack.c.bf16 %v58, %v58
  %v92 = vunpack.c.l.b16 %v25
  %v93 = vunpack.c.h.b16 %v25
  %v94 = vunpack.c.l.b16 %v26
  %v95 = vunpack.c.l.b16 %v27
  %v96 = vunpack.c.h.b16 %v27
  %v97 = vunpack.c.l.b16 %v28
  %v98 = vunpack.c.l.b16 %v29
  %v99 = vunpack.c.h.b16 %v29
  %v100 = vunpack.c.l.b16 %v30
  %v101 = vunpack.c.l.b16 %v31
  %v102 = vunpack.c.h.b16 %v31
  %v103 = vunpack.c.l.b16 %v32
  %v104 = vunpack.c.l.b16 %v33
  %v105 = vunpack.c.h.b16 %v33
  %v106 = vunpack.c.l.b16 %v34
  %v107 = vunpack.c.l.b16 %v35
  %v108 = vunpack.c.h.b16 %v35
  %v109 = vunpack.c.l.b16 %v36
  %v110 = vunpack.c.l.b16 %v37
  %v111 = vunpack.c.h.b16 %v37
  %v112 = vunpack.c.l.b16 %v38
  %v113 = vunpack.c.l.b16 %v39
  %v114 = vunpack.c.h.b16 %v39
  %v115 = vunpack.c.l.b16 %v40
  %v116 = vunpack.c.l.b16 %v41
  %v117 = vunpack.c.h.b16 %v41
  %v118 = vunpack.c.l.b16 %v42
  %v119 = vunpack.c.l.b16 %v43
  %v120 = vunpack.c.h.b16 %v43
  %v121 = vunpack.c.l.b16 %v44
  %v122 = vunpack.c.l.b16 %v45
  %v123 = vunpack.c.h.b16 %v45
  %v124 = vunpack.c.l.b16 %v46
  %v125 = vunpack.c.l.b16 %v47
  %v126 = vunpack.c.h.b16 %v47
  %v127 = vunpack.c.l.b16 %v48
  %v128 = vunpack.c.l.b16 %v49
  %v129 = vunpack.c.h.b16 %v49
  %v130 = vunpack.c.l.b16 %v50
  %v131 = vunpack.c.l.b16 %v51
  %v132 = vunpack.c.h.b16 %v51
  %v133 = vunpack.c.l.b16 %v52
  %v134 = vunpack.c.l.b16 %v53
  %v135 = vunpack.c.h.b16 %v53
  %v136 = vunpack.c.l.b16 %v54
  %v137 = vunpack.c.l.b16 %v55
  %v138 = vunpack.c.h.b16 %v55
  %v139 = vunpack.c.l.b16 %v56
  %v140 = vpack.c.b16 %v95, %v92
  %v141 = vpack.c.b16 %v96, %v93
  %v142 = vpack.c.b16 %v97, %v94
  %v143 = vpack.c.b16 %v101, %v98
  %v144 = vpack.c.b16 %v102, %v99
  %v145 = vpack.c.b16 %v103, %v100
  %v146 = vpack.c.b16 %v107, %v104
  %v147 = vpack.c.b16 %v108, %v105
  %v148 = vpack.c.b16 %v109, %v106
  %v149 = vpack.c.b16 %v113, %v110
  %v150 = vpack.c.b16 %v114, %v111
  %v151 = vpack.c.b16 %v115, %v112
  %v152 = vpack.c.b16 %v119, %v116
  %v153 = vpack.c.b16 %v120, %v117
  %v154 = vpack.c.b16 %v121, %v118
  %v155 = vpack.c.b16 %v125, %v122
  %v156 = vpack.c.b16 %v126, %v123
  %v157 = vpack.c.b16 %v127, %v124
  %v158 = vpack.c.b16 %v131, %v128
  %v159 = vpack.c.b16 %v132, %v129
  %v160 = vpack.c.b16 %v133, %v130
  %v161 = vpack.c.b16 %v137, %v134
  %v162 = vpack.c.b16 %v138, %v135
  %v163 = vpack.c.b16 %v139, %v136
  %188 = vmatpush.bf16.msra.mxu0 %v161
  %189 = vmatpush.bf16.msra.mxu0 %v158
  %190 = vmatpush.bf16.msra.mxu0 %v155
  %191 = vmatpush.bf16.msra.mxu0 %v152
  %192 = vmatpush.bf16.msra.mxu0 %v149
  %193 = vmatpush.bf16.msra.mxu0 %v146
  %194 = vmatpush.bf16.msra.mxu0 %v143
  %195 = vmatpush.bf16.msra.mxu0 %v140
  %196 = vmatmul.bf16.gmra.mxu0 %v59
  %v197 = vpop.f32.mrf.mxu0
  %v198 = vadd.f32 0.0, %v197
  %v199 = vpop.f32.mrf.mxu0
  %200 = vdwg.mxu0
  %201 = vmatpush.bf16.msra.mxu0 %v162
  %202 = vmatpush.bf16.msra.mxu0 %v159
  %203 = vmatpush.bf16.msra.mxu0 %v156
  %204 = vmatpush.bf16.msra.mxu0 %v153
  %205 = vmatpush.bf16.msra.mxu0 %v150
  %206 = vmatpush.bf16.msra.mxu0 %v147
  %207 = vmatpush.bf16.msra.mxu0 %v144
  %208 = vmatpush.bf16.msra.mxu0 %v141
  %209 = vmatmul.bf16.gmra.mxu0 %v59
  %v210 = vpop.f32.mrf.mxu0
  %v211 = vadd.f32 0.0, %v210
  %v212 = vpop.f32.mrf.mxu0
  %213 = vdwg.mxu0
  %214 = vmatpush.bf16.msra.mxu0 %v163
  %215 = vmatpush.bf16.msra.mxu0 %v160
  %216 = vmatpush.bf16.msra.mxu0 %v157
  %217 = vmatpush.bf16.msra.mxu0 %v154
  %218 = vmatpush.bf16.msra.mxu0 %v151
  %219 = vmatpush.bf16.msra.mxu0 %v148
  %220 = vmatpush.bf16.msra.mxu0 %v145
  %221 = vmatpush.bf16.msra.mxu0 %v142
  %222 = vmatmul.bf16.gmra.mxu0 %v59
  %v223 = vpop.f32.mrf.mxu0
  %v224 = vadd.f32 0.0, %v223
  %v225 = vpop.f32.mrf.mxu0
  %226 = vdwg.mxu0
  %v227 = vld [vmem:[%s1] sm:$0xff]
  %v228 = vld [vmem:[%s1 + $0x8] sm:$0xf]
  %v229 = vunpack.c.l.bf16 %v227
  %v230 = vunpack.c.h.bf16 %v227
  %v231 = vunpack.c.l.bf16 %v228
  %v232 = vadd.f32 %v229, %v198
  %v233 = vxor.u32 %v232, 2147483648
  %v234 = vmul.f32 %v233, 1.442695
  %v235 = vpow.pop %v234
  %v236 = vadd.f32 %v235, 1.0
  %v237 = vrcp.pop %v236
  %v238 = vmul.f32 %v236, %v237
  %v239 = vsub.f32 1.0, %v238
  %v240 = vmul.f32 %v237, %v239
  %v241 = vadd.f32 %v237, %v240
  %vm242 = vweird.f32 %v236
  %vm243 = vweird.f32 %v237
  %vm244 = vmor %vm242, %vm243
  %v245 = vsel %vm244, %v237, %v241
  %v246 = vand.u32 2147483647, %v236
  %vm247 = vcmp.eq.f32.partialorder %v246, 8.507059e+37
  %v248 = vand.u32 %v236, 2147483648
  %v249 = vor.u32 1.1754944e-38, %v248
  %v250 = vsel %vm247, %v249, %v245
  %v251 = vmul.f32 1.0, %v250
  %v252 = vadd.f32 %v230, %v211
  %v253 = vxor.u32 %v252, 2147483648
  %v254 = vmul.f32 %v253, 1.442695
  %v255 = vpow.pop %v254
  %v256 = vadd.f32 %v255, 1.0
  %v257 = vrcp.pop %v256
  %v258 = vmul.f32 %v256, %v257
  %v259 = vsub.f32 1.0, %v258
  %v260 = vmul.f32 %v257, %v259
  %v261 = vadd.f32 %v257, %v260
  %vm262 = vweird.f32 %v256
  %vm263 = vweird.f32 %v257
  %vm264 = vmor %vm262, %vm263
  %v265 = vsel %vm264, %v257, %v261
  %v266 = vand.u32 2147483647, %v256
  %vm267 = vcmp.eq.f32.partialorder %v266, 8.507059e+37
  %v268 = vand.u32 %v256, 2147483648
  %v269 = vor.u32 1.1754944e-38, %v268
  %v270 = vsel %vm267, %v269, %v265
  %v271 = vmul.f32 1.0, %v270
  %v273 = vperm.slane %v57, 0
  %v275 = vadd.f32 %v224, %v273
  %v276 = vmul.f32 %v251, %v275
  %v277 = vadd.f32 %v231, %v276
  %v278 = vtanh.pop %v277
  %v279 = vsub.f32 1.0, %v271
  %v280 = vmul.f32 %v279, %v278
  %v281 = vmul.f32 %v271, %v58
  %v282 = vadd.f32 %v280, %v281
  %283 = vst [vmem:[%s4] sm:$0xff] %v282
  %v284 = vpack.c.bf16 %v282, %v282
  %285 = vmatpush.bf16.msra.mxu0 %v161
  %286 = vmatpush.bf16.msra.mxu0 %v158
  %287 = vmatpush.bf16.msra.mxu0 %v155
  %288 = vmatpush.bf16.msra.mxu0 %v152
  %289 = vmatpush.bf16.msra.mxu0 %v149
  %290 = vmatpush.bf16.msra.mxu0 %v146
  %291 = vmatpush.bf16.msra.mxu0 %v143
  %292 = vmatpush.bf16.msra.mxu0 %v140
  %293 = vmatmul.bf16.gmra.mxu0 %v284
  %v294 = vpop.f32.mrf.mxu0
  %v295 = vadd.f32 0.0, %v294
  %v296 = vpop.f32.mrf.mxu0
  %297 = vdwg.mxu0
  %298 = vmatpush.bf16.msra.mxu0 %v162
  %299 = vmatpush.bf16.msra.mxu0 %v159
  %300 = vmatpush.bf16.msra.mxu0 %v156
  %301 = vmatpush.bf16.msra.mxu0 %v153
  %302 = vmatpush.bf16.msra.mxu0 %v150
  %303 = vmatpush.bf16.msra.mxu0 %v147
  %304 = vmatpush.bf16.msra.mxu0 %v144
  %305 = vmatpush.bf16.msra.mxu0 %v141
  %306 = vmatmul.bf16.gmra.mxu0 %v284
  %v307 = vpop.f32.mrf.mxu0
  %v308 = vadd.f32 0.0, %v307
  %v309 = vpop.f32.mrf.mxu0
  %310 = vdwg.mxu0
  %311 = vmatpush.bf16.msra.mxu0 %v163
  %312 = vmatpush.bf16.msra.mxu0 %v160
  %313 = vmatpush.bf16.msra.mxu0 %v157
  %314 = vmatpush.bf16.msra.mxu0 %v154
  %315 = vmatpush.bf16.msra.mxu0 %v151
  %316 = vmatpush.bf16.msra.mxu0 %v148
  %317 = vmatpush.bf16.msra.mxu0 %v145
  %318 = vmatpush.bf16.msra.mxu0 %v142
  %319 = vmatmul.bf16.gmra.mxu0 %v284
  %v320 = vpop.f32.mrf.mxu0
  %v321 = vadd.f32 0.0, %v320
  %v322 = vpop.f32.mrf.mxu0
  %323 = vdwg.mxu0
  %s324 = scalar_lea.vmem %s1, 12
  %v325 = vld [vmem:[%s324] sm:$0xff]
  %v326 = vld [vmem:[%s324 + $0x8] sm:$0xf]
  %v327 = vunpack.c.l.bf16 %v325
  %v328 = vunpack.c.h.bf16 %v325
  %v329 = vunpack.c.l.bf16 %v326
  %v330 = vadd.f32 %v327, %v295
  %v331 = vxor.u32 %v330, 2147483648
  %v332 = vmul.f32 %v331, 1.442695
  %v333 = vpow.pop %v332
  %v334 = vadd.f32 %v333, 1.0
  %v335 = vrcp.pop %v334
  %v336 = vmul.f32 %v334, %v335
  %v337 = vsub.f32 1.0, %v336
  %v338 = vmul.f32 %v335, %v337
  %v339 = vadd.f32 %v335, %v338
  %vm340 = vweird.f32 %v334
  %vm341 = vweird.f32 %v335
  %vm342 = vmor %vm340, %vm341
  %v343 = vsel %vm342, %v335, %v339
  %v344 = vand.u32 2147483647, %v334
  %vm345 = vcmp.eq.f32.partialorder %v344, 8.507059e+37
  %v346 = vand.u32 %v334, 2147483648
  %v347 = vor.u32 1.1754944e-38, %v346
  %v348 = vsel %vm345, %v347, %v343
  %v349 = vmul.f32 1.0, %v348
  %v350 = vadd.f32 %v328, %v308
  %v351 = vxor.u32 %v350, 2147483648
  %v352 = vmul.f32 %v351, 1.442695
  %v353 = vpow.pop %v352
  %v354 = vadd.f32 %v353, 1.0
  %v355 = vrcp.pop %v354
  %v356 = vmul.f32 %v354, %v355
  %v357 = vsub.f32 1.0, %v356
  %v358 = vmul.f32 %v355, %v357
  %v359 = vadd.f32 %v355, %v358
  %vm360 = vweird.f32 %v354
  %vm361 = vweird.f32 %v355
  %vm362 = vmor %vm360, %vm361
  %v363 = vsel %vm362, %v355, %v359
  %v364 = vand.u32 2147483647, %v354
  %vm365 = vcmp.eq.f32.partialorder %v364, 8.507059e+37
  %v366 = vand.u32 %v354, 2147483648
  %v367 = vor.u32 1.1754944e-38, %v366
  %v368 = vsel %vm365, %v367, %v363
  %v369 = vmul.f32 1.0, %v368
  %v370 = vadd.f32 %v321, %v273
  %v371 = vmul.f32 %v349, %v370
  %v372 = vadd.f32 %v329, %v371
  %v373 = vtanh.pop %v372
  %v374 = vsub.f32 1.0, %v369
  %v375 = vmul.f32 %v374, %v373
  %v376 = vmul.f32 %v369, %v282
  %v377 = vadd.f32 %v375, %v376
  %s378 = scalar_lea.vmem %s4, 8
  %379 = vst [vmem:[%s378] sm:$0xff] %v377
  %v380 = vpack.c.bf16 %v377, %v377
  %381 = vmatpush.bf16.msra.mxu0 %v161
  %382 = vmatpush.bf16.msra.mxu0 %v158
  %383 = vmatpush.bf16.msra.mxu0 %v155
  %384 = vmatpush.bf16.msra.mxu0 %v152
  %385 = vmatpush.bf16.msra.mxu0 %v149
  %386 = vmatpush.bf16.msra.mxu0 %v146
  %387 = vmatpush.bf16.msra.mxu0 %v143
  %388 = vmatpush.bf16.msra.mxu0 %v140
  %389 = vmatmul.bf16.gmra.mxu0 %v380
  %v390 = vpop.f32.mrf.mxu0
  %v391 = vadd.f32 0.0, %v390
  %v392 = vpop.f32.mrf.mxu0
  %393 = vdwg.mxu0
  %394 = vmatpush.bf16.msra.mxu0 %v162
  %395 = vmatpush.bf16.msra.mxu0 %v159
  %396 = vmatpush.bf16.msra.mxu0 %v156
  %397 = vmatpush.bf16.msra.mxu0 %v153
  %398 = vmatpush.bf16.msra.mxu0 %v150
  %399 = vmatpush.bf16.msra.mxu0 %v147
  %400 = vmatpush.bf16.msra.mxu0 %v144
  %401 = vmatpush.bf16.msra.mxu0 %v141
  %402 = vmatmul.bf16.gmra.mxu0 %v380
  %v403 = vpop.f32.mrf.mxu0
  %v404 = vadd.f32 0.0, %v403
  %v405 = vpop.f32.mrf.mxu0
  %406 = vdwg.mxu0
  %407 = vmatpush.bf16.msra.mxu0 %v163
  %408 = vmatpush.bf16.msra.mxu0 %v160
  %409 = vmatpush.bf16.msra.mxu0 %v157
  %410 = vmatpush.bf16.msra.mxu0 %v154
  %411 = vmatpush.bf16.msra.mxu0 %v151
  %412 = vmatpush.bf16.msra.mxu0 %v148
  %413 = vmatpush.bf16.msra.mxu0 %v145
  %414 = vmatpush.bf16.msra.mxu0 %v142
  %415 = vmatmul.bf16.gmra.mxu0 %v380
  %v416 = vpop.f32.mrf.mxu0
  %v417 = vadd.f32 0.0, %v416
  %v418 = vpop.f32.mrf.mxu0
  %419 = vdwg.mxu0
  %s420 = scalar_lea.vmem %s1, 24
  %v421 = vld [vmem:[%s420] sm:$0xff]
  %v422 = vld [vmem:[%s420 + $0x8] sm:$0xf]
  %v423 = vunpack.c.l.bf16 %v421
  %v424 = vunpack.c.h.bf16 %v421
  %v425 = vunpack.c.l.bf16 %v422
  %v426 = vadd.f32 %v423, %v391
  %v427 = vxor.u32 %v426, 2147483648
  %v428 = vmul.f32 %v427, 1.442695
  %v429 = vpow.pop %v428
  %v430 = vadd.f32 %v429, 1.0
  %v431 = vrcp.pop %v430
  %v432 = vmul.f32 %v430, %v431
  %v433 = vsub.f32 1.0, %v432
  %v434 = vmul.f32 %v431, %v433
  %v435 = vadd.f32 %v431, %v434
  %vm436 = vweird.f32 %v430
  %vm437 = vweird.f32 %v431
  %vm438 = vmor %vm436, %vm437
  %v439 = vsel %vm438, %v431, %v435
  %v440 = vand.u32 2147483647, %v430
  %vm441 = vcmp.eq.f32.partialorder %v440, 8.507059e+37
  %v442 = vand.u32 %v430, 2147483648
  %v443 = vor.u32 1.1754944e-38, %v442
  %v444 = vsel %vm441, %v443, %v439
  %v445 = vmul.f32 1.0, %v444
  %v446 = vadd.f32 %v424, %v404
  %v447 = vxor.u32 %v446, 2147483648
  %v448 = vmul.f32 %v447, 1.442695
  %v449 = vpow.pop %v448
  %v450 = vadd.f32 %v449, 1.0
  %v451 = vrcp.pop %v450
  %v452 = vmul.f32 %v450, %v451
  %v453 = vsub.f32 1.0, %v452
  %v454 = vmul.f32 %v451, %v453
  %v455 = vadd.f32 %v451, %v454
  %vm456 = vweird.f32 %v450
  %vm457 = vweird.f32 %v451
  %vm458 = vmor %vm456, %vm457
  %v459 = vsel %vm458, %v451, %v455
  %v460 = vand.u32 2147483647, %v450
  %vm461 = vcmp.eq.f32.partialorder %v460, 8.507059e+37
  %v462 = vand.u32 %v450, 2147483648
  %v463 = vor.u32 1.1754944e-38, %v462
  %v464 = vsel %vm461, %v463, %v459
  %v465 = vmul.f32 1.0, %v464
  %v466 = vadd.f32 %v417, %v273
  %v467 = vmul.f32 %v445, %v466
  %v468 = vadd.f32 %v425, %v467
  %v469 = vtanh.pop %v468
  %v470 = vsub.f32 1.0, %v465
  %v471 = vmul.f32 %v470, %v469
  %v472 = vmul.f32 %v465, %v377
  %v473 = vadd.f32 %v471, %v472
  %s474 = scalar_lea.vmem %s4, 16
  %475 = vst [vmem:[%s474] sm:$0xff] %v473
  %v476 = vpack.c.bf16 %v473, %v473
  %477 = vmatpush.bf16.msra.mxu0 %v161
  %478 = vmatpush.bf16.msra.mxu0 %v158
  %479 = vmatpush.bf16.msra.mxu0 %v155
  %480 = vmatpush.bf16.msra.mxu0 %v152
  %481 = vmatpush.bf16.msra.mxu0 %v149
  %482 = vmatpush.bf16.msra.mxu0 %v146
  %483 = vmatpush.bf16.msra.mxu0 %v143
  %484 = vmatpush.bf16.msra.mxu0 %v140
  %485 = vmatmul.bf16.gmra.mxu0 %v476
  %v486 = vpop.f32.mrf.mxu0
  %v487 = vadd.f32 0.0, %v486
  %v488 = vpop.f32.mrf.mxu0
  %489 = vdwg.mxu0
  %490 = vmatpush.bf16.msra.mxu0 %v162
  %491 = vmatpush.bf16.msra.mxu0 %v159
  %492 = vmatpush.bf16.msra.mxu0 %v156
  %493 = vmatpush.bf16.msra.mxu0 %v153
  %494 = vmatpush.bf16.msra.mxu0 %v150
  %495 = vmatpush.bf16.msra.mxu0 %v147
  %496 = vmatpush.bf16.msra.mxu0 %v144
  %497 = vmatpush.bf16.msra.mxu0 %v141
  %498 = vmatmul.bf16.gmra.mxu0 %v476
  %v499 = vpop.f32.mrf.mxu0
  %v500 = vadd.f32 0.0, %v499
  %v501 = vpop.f32.mrf.mxu0
  %502 = vdwg.mxu0
  %503 = vmatpush.bf16.msra.mxu0 %v163
  %504 = vmatpush.bf16.msra.mxu0 %v160
  %505 = vmatpush.bf16.msra.mxu0 %v157
  %506 = vmatpush.bf16.msra.mxu0 %v154
  %507 = vmatpush.bf16.msra.mxu0 %v151
  %508 = vmatpush.bf16.msra.mxu0 %v148
  %509 = vmatpush.bf16.msra.mxu0 %v145
  %510 = vmatpush.bf16.msra.mxu0 %v142
  %511 = vmatmul.bf16.gmra.mxu0 %v476
  %v512 = vpop.f32.mrf.mxu0
  %v513 = vadd.f32 0.0, %v512
  %v514 = vpop.f32.mrf.mxu0
  %515 = vdwg.mxu0
  %s516 = scalar_lea.vmem %s1, 36
  %v517 = vld [vmem:[%s516] sm:$0xff]
  %v518 = vld [vmem:[%s516 + $0x8] sm:$0xf]
  %v519 = vunpack.c.l.bf16 %v517
  %v520 = vunpack.c.h.bf16 %v517
  %v521 = vunpack.c.l.bf16 %v518
  %v522 = vadd.f32 %v519, %v487
  %v523 = vxor.u32 %v522, 2147483648
  %v524 = vmul.f32 %v523, 1.442695
  %v525 = vpow.pop %v524
  %v526 = vadd.f32 %v525, 1.0
  %v527 = vrcp.pop %v526
  %v528 = vmul.f32 %v526, %v527
  %v529 = vsub.f32 1.0, %v528
  %v530 = vmul.f32 %v527, %v529
  %v531 = vadd.f32 %v527, %v530
  %vm532 = vweird.f32 %v526
  %vm533 = vweird.f32 %v527
  %vm534 = vmor %vm532, %vm533
  %v535 = vsel %vm534, %v527, %v531
  %v536 = vand.u32 2147483647, %v526
  %vm537 = vcmp.eq.f32.partialorder %v536, 8.507059e+37
  %v538 = vand.u32 %v526, 2147483648
  %v539 = vor.u32 1.1754944e-38, %v538
  %v540 = vsel %vm537, %v539, %v535
  %v541 = vmul.f32 1.0, %v540
  %v542 = vadd.f32 %v520, %v500
  %v543 = vxor.u32 %v542, 2147483648
  %v544 = vmul.f32 %v543, 1.442695
  %v545 = vpow.pop %v544
  %v546 = vadd.f32 %v545, 1.0
  %v547 = vrcp.pop %v546
  %v548 = vmul.f32 %v546, %v547
  %v549 = vsub.f32 1.0, %v548
  %v550 = vmul.f32 %v547, %v549
  %v551 = vadd.f32 %v547, %v550
  %vm552 = vweird.f32 %v546
  %vm553 = vweird.f32 %v547
  %vm554 = vmor %vm552, %vm553
  %v555 = vsel %vm554, %v547, %v551
  %v556 = vand.u32 2147483647, %v546
  %vm557 = vcmp.eq.f32.partialorder %v556, 8.507059e+37
  %v558 = vand.u32 %v546, 2147483648
  %v559 = vor.u32 1.1754944e-38, %v558
  %v560 = vsel %vm557, %v559, %v555
  %v561 = vmul.f32 1.0, %v560
  %v562 = vadd.f32 %v513, %v273
  %v563 = vmul.f32 %v541, %v562
  %v564 = vadd.f32 %v521, %v563
  %v565 = vtanh.pop %v564
  %v566 = vsub.f32 1.0, %v561
  %v567 = vmul.f32 %v566, %v565
  %v568 = vmul.f32 %v561, %v473
  %v569 = vadd.f32 %v567, %v568
  %s570 = scalar_lea.vmem %s4, 24
  %571 = vst [vmem:[%s570] sm:$0xff] %v569
  %v572 = vpack.c.bf16 %v569, %v569
  %573 = vmatpush.bf16.msra.mxu0 %v161
  %574 = vmatpush.bf16.msra.mxu0 %v158
  %575 = vmatpush.bf16.msra.mxu0 %v155
  %576 = vmatpush.bf16.msra.mxu0 %v152
  %577 = vmatpush.bf16.msra.mxu0 %v149
  %578 = vmatpush.bf16.msra.mxu0 %v146
  %579 = vmatpush.bf16.msra.mxu0 %v143
  %580 = vmatpush.bf16.msra.mxu0 %v140
  %581 = vmatmul.bf16.gmra.mxu0 %v572
  %v582 = vpop.f32.mrf.mxu0
  %v583 = vadd.f32 0.0, %v582
  %v584 = vpop.f32.mrf.mxu0
  %585 = vdwg.mxu0
  %586 = vmatpush.bf16.msra.mxu0 %v162
  %587 = vmatpush.bf16.msra.mxu0 %v159
  %588 = vmatpush.bf16.msra.mxu0 %v156
  %589 = vmatpush.bf16.msra.mxu0 %v153
  %590 = vmatpush.bf16.msra.mxu0 %v150
  %591 = vmatpush.bf16.msra.mxu0 %v147
  %592 = vmatpush.bf16.msra.mxu0 %v144
  %593 = vmatpush.bf16.msra.mxu0 %v141
  %594 = vmatmul.bf16.gmra.mxu0 %v572
  %v595 = vpop.f32.mrf.mxu0
  %v596 = vadd.f32 0.0, %v595
  %v597 = vpop.f32.mrf.mxu0
  %598 = vdwg.mxu0
  %599 = vmatpush.bf16.msra.mxu0 %v163
  %600 = vmatpush.bf16.msra.mxu0 %v160
  %601 = vmatpush.bf16.msra.mxu0 %v157
  %602 = vmatpush.bf16.msra.mxu0 %v154
  %603 = vmatpush.bf16.msra.mxu0 %v151
  %604 = vmatpush.bf16.msra.mxu0 %v148
  %605 = vmatpush.bf16.msra.mxu0 %v145
  %606 = vmatpush.bf16.msra.mxu0 %v142
  %607 = vmatmul.bf16.gmra.mxu0 %v572
  %v608 = vpop.f32.mrf.mxu0
  %v609 = vadd.f32 0.0, %v608
  %v610 = vpop.f32.mrf.mxu0
  %611 = vdwg.mxu0
  %s612 = scalar_lea.vmem %s1, 48
  %v613 = vld [vmem:[%s612] sm:$0xff]
  %v614 = vld [vmem:[%s612 + $0x8] sm:$0xf]
  %v615 = vunpack.c.l.bf16 %v613
  %v616 = vunpack.c.h.bf16 %v613
  %v617 = vunpack.c.l.bf16 %v614
  %v618 = vadd.f32 %v615, %v583
  %v619 = vxor.u32 %v618, 2147483648
  %v620 = vmul.f32 %v619, 1.442695
  %v621 = vpow.pop %v620
  %v622 = vadd.f32 %v621, 1.0
  %v623 = vrcp.pop %v622
  %v624 = vmul.f32 %v622, %v623
  %v625 = vsub.f32 1.0, %v624
  %v626 = vmul.f32 %v623, %v625
  %v627 = vadd.f32 %v623, %v626
  %vm628 = vweird.f32 %v622
  %vm629 = vweird.f32 %v623
  %vm630 = vmor %vm628, %vm629
  %v631 = vsel %vm630, %v623, %v627
  %v632 = vand.u32 2147483647, %v622
  %vm633 = vcmp.eq.f32.partialorder %v632, 8.507059e+37
  %v634 = vand.u32 %v622, 2147483648
  %v635 = vor.u32 1.1754944e-38, %v634
  %v636 = vsel %vm633, %v635, %v631
  %v637 = vmul.f32 1.0, %v636
  %v638 = vadd.f32 %v616, %v596
  %v639 = vxor.u32 %v638, 2147483648
  %v640 = vmul.f32 %v639, 1.442695
  %v641 = vpow.pop %v640
  %v642 = vadd.f32 %v641, 1.0
  %v643 = vrcp.pop %v642
  %v644 = vmul.f32 %v642, %v643
  %v645 = vsub.f32 1.0, %v644
  %v646 = vmul.f32 %v643, %v645
  %v647 = vadd.f32 %v643, %v646
  %vm648 = vweird.f32 %v642
  %vm649 = vweird.f32 %v643
  %vm650 = vmor %vm648, %vm649
  %v651 = vsel %vm650, %v643, %v647
  %v652 = vand.u32 2147483647, %v642
  %vm653 = vcmp.eq.f32.partialorder %v652, 8.507059e+37
  %v654 = vand.u32 %v642, 2147483648
  %v655 = vor.u32 1.1754944e-38, %v654
  %v656 = vsel %vm653, %v655, %v651
  %v657 = vmul.f32 1.0, %v656
  %v658 = vadd.f32 %v609, %v273
  %v659 = vmul.f32 %v637, %v658
  %v660 = vadd.f32 %v617, %v659
  %v661 = vtanh.pop %v660
  %v662 = vsub.f32 1.0, %v657
  %v663 = vmul.f32 %v662, %v661
  %v664 = vmul.f32 %v657, %v569
  %v665 = vadd.f32 %v663, %v664
  %s666 = scalar_lea.vmem %s4, 32
  %667 = vst [vmem:[%s666] sm:$0xff] %v665
  %v668 = vpack.c.bf16 %v665, %v665
  %669 = vmatpush.bf16.msra.mxu0 %v161
  %670 = vmatpush.bf16.msra.mxu0 %v158
  %671 = vmatpush.bf16.msra.mxu0 %v155
  %672 = vmatpush.bf16.msra.mxu0 %v152
  %673 = vmatpush.bf16.msra.mxu0 %v149
  %674 = vmatpush.bf16.msra.mxu0 %v146
  %675 = vmatpush.bf16.msra.mxu0 %v143
  %676 = vmatpush.bf16.msra.mxu0 %v140
  %677 = vmatmul.bf16.gmra.mxu0 %v668
  %v678 = vpop.f32.mrf.mxu0
  %v679 = vadd.f32 0.0, %v678
  %v680 = vpop.f32.mrf.mxu0
  %681 = vdwg.mxu0
  %682 = vmatpush.bf16.msra.mxu0 %v162
  %683 = vmatpush.bf16.msra.mxu0 %v159
  %684 = vmatpush.bf16.msra.mxu0 %v156
  %685 = vmatpush.bf16.msra.mxu0 %v153
  %686 = vmatpush.bf16.msra.mxu0 %v150
  %687 = vmatpush.bf16.msra.mxu0 %v147
  %688 = vmatpush.bf16.msra.mxu0 %v144
  %689 = vmatpush.bf16.msra.mxu0 %v141
  %690 = vmatmul.bf16.gmra.mxu0 %v668
  %v691 = vpop.f32.mrf.mxu0
  %v692 = vadd.f32 0.0, %v691
  %v693 = vpop.f32.mrf.mxu0
  %694 = vdwg.mxu0
  %695 = vmatpush.bf16.msra.mxu0 %v163
  %696 = vmatpush.bf16.msra.mxu0 %v160
  %697 = vmatpush.bf16.msra.mxu0 %v157
  %698 = vmatpush.bf16.msra.mxu0 %v154
  %699 = vmatpush.bf16.msra.mxu0 %v151
  %700 = vmatpush.bf16.msra.mxu0 %v148
  %701 = vmatpush.bf16.msra.mxu0 %v145
  %702 = vmatpush.bf16.msra.mxu0 %v142
  %703 = vmatmul.bf16.gmra.mxu0 %v668
  %v704 = vpop.f32.mrf.mxu0
  %v705 = vadd.f32 0.0, %v704
  %v706 = vpop.f32.mrf.mxu0
  %707 = vdwg.mxu0
  %s708 = scalar_lea.vmem %s1, 60
  %v709 = vld [vmem:[%s708] sm:$0xff]
  %v710 = vld [vmem:[%s708 + $0x8] sm:$0xf]
  %v711 = vunpack.c.l.bf16 %v709
  %v712 = vunpack.c.h.bf16 %v709
  %v713 = vunpack.c.l.bf16 %v710
  %v714 = vadd.f32 %v711, %v679
  %v715 = vxor.u32 %v714, 2147483648
  %v716 = vmul.f32 %v715, 1.442695
  %v717 = vpow.pop %v716
  %v718 = vadd.f32 %v717, 1.0
  %v719 = vrcp.pop %v718
  %v720 = vmul.f32 %v718, %v719
  %v721 = vsub.f32 1.0, %v720
  %v722 = vmul.f32 %v719, %v721
  %v723 = vadd.f32 %v719, %v722
  %vm724 = vweird.f32 %v718
  %vm725 = vweird.f32 %v719
  %vm726 = vmor %vm724, %vm725
  %v727 = vsel %vm726, %v719, %v723
  %v728 = vand.u32 2147483647, %v718
  %vm729 = vcmp.eq.f32.partialorder %v728, 8.507059e+37
  %v730 = vand.u32 %v718, 2147483648
  %v731 = vor.u32 1.1754944e-38, %v730
  %v732 = vsel %vm729, %v731, %v727
  %v733 = vmul.f32 1.0, %v732
  %v734 = vadd.f32 %v712, %v692
  %v735 = vxor.u32 %v734, 2147483648
  %v736 = vmul.f32 %v735, 1.442695
  %v737 = vpow.pop %v736
  %v738 = vadd.f32 %v737, 1.0
  %v739 = vrcp.pop %v738
  %v740 = vmul.f32 %v738, %v739
  %v741 = vsub.f32 1.0, %v740
  %v742 = vmul.f32 %v739, %v741
  %v743 = vadd.f32 %v739, %v742
  %vm744 = vweird.f32 %v738
  %vm745 = vweird.f32 %v739
  %vm746 = vmor %vm744, %vm745
  %v747 = vsel %vm746, %v739, %v743
  %v748 = vand.u32 2147483647, %v738
  %vm749 = vcmp.eq.f32.partialorder %v748, 8.507059e+37
  %v750 = vand.u32 %v738, 2147483648
  %v751 = vor.u32 1.1754944e-38, %v750
  %v752 = vsel %vm749, %v751, %v747
  %v753 = vmul.f32 1.0, %v752
  %v754 = vadd.f32 %v705, %v273
  %v755 = vmul.f32 %v733, %v754
  %v756 = vadd.f32 %v713, %v755
  %v757 = vtanh.pop %v756
  %v758 = vsub.f32 1.0, %v753
  %v759 = vmul.f32 %v758, %v757
  %v760 = vmul.f32 %v753, %v665
  %v761 = vadd.f32 %v759, %v760
  %s762 = scalar_lea.vmem %s4, 40
  %763 = vst [vmem:[%s762] sm:$0xff] %v761
  %v764 = vpack.c.bf16 %v761, %v761
  %765 = vmatpush.bf16.msra.mxu0 %v161
  %766 = vmatpush.bf16.msra.mxu0 %v158
  %767 = vmatpush.bf16.msra.mxu0 %v155
  %768 = vmatpush.bf16.msra.mxu0 %v152
  %769 = vmatpush.bf16.msra.mxu0 %v149
  %770 = vmatpush.bf16.msra.mxu0 %v146
  %771 = vmatpush.bf16.msra.mxu0 %v143
  %772 = vmatpush.bf16.msra.mxu0 %v140
  %773 = vmatmul.bf16.gmra.mxu0 %v764
  %v774 = vpop.f32.mrf.mxu0
  %v775 = vadd.f32 0.0, %v774
  %v776 = vpop.f32.mrf.mxu0
  %777 = vdwg.mxu0
  %778 = vmatpush.bf16.msra.mxu0 %v162
  %779 = vmatpush.bf16.msra.mxu0 %v159
  %780 = vmatpush.bf16.msra.mxu0 %v156
  %781 = vmatpush.bf16.msra.mxu0 %v153
  %782 = vmatpush.bf16.msra.mxu0 %v150
  %783 = vmatpush.bf16.msra.mxu0 %v147
  %784 = vmatpush.bf16.msra.mxu0 %v144
  %785 = vmatpush.bf16.msra.mxu0 %v141
  %786 = vmatmul.bf16.gmra.mxu0 %v764
  %v787 = vpop.f32.mrf.mxu0
  %v788 = vadd.f32 0.0, %v787
  %v789 = vpop.f32.mrf.mxu0
  %790 = vdwg.mxu0
  %791 = vmatpush.bf16.msra.mxu0 %v163
  %792 = vmatpush.bf16.msra.mxu0 %v160
  %793 = vmatpush.bf16.msra.mxu0 %v157
  %794 = vmatpush.bf16.msra.mxu0 %v154
  %795 = vmatpush.bf16.msra.mxu0 %v151
  %796 = vmatpush.bf16.msra.mxu0 %v148
  %797 = vmatpush.bf16.msra.mxu0 %v145
  %798 = vmatpush.bf16.msra.mxu0 %v142
  %799 = vmatmul.bf16.gmra.mxu0 %v764
  %v800 = vpop.f32.mrf.mxu0
  %v801 = vadd.f32 0.0, %v800
  %v802 = vpop.f32.mrf.mxu0
  %803 = vdwg.mxu0
  %s804 = scalar_lea.vmem %s1, 72
  %v805 = vld [vmem:[%s804] sm:$0xff]
  %v806 = vld [vmem:[%s804 + $0x8] sm:$0xf]
  %v807 = vunpack.c.l.bf16 %v805
  %v808 = vunpack.c.h.bf16 %v805
  %v809 = vunpack.c.l.bf16 %v806
  %v810 = vadd.f32 %v807, %v775
  %v811 = vxor.u32 %v810, 2147483648
  %v812 = vmul.f32 %v811, 1.442695
  %v813 = vpow.pop %v812
  %v814 = vadd.f32 %v813, 1.0
  %v815 = vrcp.pop %v814
  %v816 = vmul.f32 %v814, %v815
  %v817 = vsub.f32 1.0, %v816
  %v818 = vmul.f32 %v815, %v817
  %v819 = vadd.f32 %v815, %v818
  %vm820 = vweird.f32 %v814
  %vm821 = vweird.f32 %v815
  %vm822 = vmor %vm820, %vm821
  %v823 = vsel %vm822, %v815, %v819
  %v824 = vand.u32 2147483647, %v814
  %vm825 = vcmp.eq.f32.partialorder %v824, 8.507059e+37
  %v826 = vand.u32 %v814, 2147483648
  %v827 = vor.u32 1.1754944e-38, %v826
  %v828 = vsel %vm825, %v827, %v823
  %v829 = vmul.f32 1.0, %v828
  %v830 = vadd.f32 %v808, %v788
  %v831 = vxor.u32 %v830, 2147483648
  %v832 = vmul.f32 %v831, 1.442695
  %v833 = vpow.pop %v832
  %v834 = vadd.f32 %v833, 1.0
  %v835 = vrcp.pop %v834
  %v836 = vmul.f32 %v834, %v835
  %v837 = vsub.f32 1.0, %v836
  %v838 = vmul.f32 %v835, %v837
  %v839 = vadd.f32 %v835, %v838
  %vm840 = vweird.f32 %v834
  %vm841 = vweird.f32 %v835
  %vm842 = vmor %vm840, %vm841
  %v843 = vsel %vm842, %v835, %v839
  %v844 = vand.u32 2147483647, %v834
  %vm845 = vcmp.eq.f32.partialorder %v844, 8.507059e+37
  %v846 = vand.u32 %v834, 2147483648
  %v847 = vor.u32 1.1754944e-38, %v846
  %v848 = vsel %vm845, %v847, %v843
  %v849 = vmul.f32 1.0, %v848
  %v850 = vadd.f32 %v801, %v273
  %v851 = vmul.f32 %v829, %v850
  %v852 = vadd.f32 %v809, %v851
  %v853 = vtanh.pop %v852
  %v854 = vsub.f32 1.0, %v849
  %v855 = vmul.f32 %v854, %v853
  %v856 = vmul.f32 %v849, %v761
  %v857 = vadd.f32 %v855, %v856
  %s858 = scalar_lea.vmem %s4, 48
  %859 = vst [vmem:[%s858] sm:$0xff] %v857
  %v860 = vpack.c.bf16 %v857, %v857
  %861 = vmatpush.bf16.msra.mxu0 %v161
  %862 = vmatpush.bf16.msra.mxu0 %v158
  %863 = vmatpush.bf16.msra.mxu0 %v155
  %864 = vmatpush.bf16.msra.mxu0 %v152
  %865 = vmatpush.bf16.msra.mxu0 %v149
  %866 = vmatpush.bf16.msra.mxu0 %v146
  %867 = vmatpush.bf16.msra.mxu0 %v143
  %868 = vmatpush.bf16.msra.mxu0 %v140
  %869 = vmatmul.bf16.gmra.mxu0 %v860
  %v870 = vpop.f32.mrf.mxu0
  %v871 = vadd.f32 0.0, %v870
  %v872 = vpop.f32.mrf.mxu0
  %873 = vdwg.mxu0
  %874 = vmatpush.bf16.msra.mxu0 %v162
  %875 = vmatpush.bf16.msra.mxu0 %v159
  %876 = vmatpush.bf16.msra.mxu0 %v156
  %877 = vmatpush.bf16.msra.mxu0 %v153
  %878 = vmatpush.bf16.msra.mxu0 %v150
  %879 = vmatpush.bf16.msra.mxu0 %v147
  %880 = vmatpush.bf16.msra.mxu0 %v144
  %881 = vmatpush.bf16.msra.mxu0 %v141
  %882 = vmatmul.bf16.gmra.mxu0 %v860
  %v883 = vpop.f32.mrf.mxu0
  %v884 = vadd.f32 0.0, %v883
  %v885 = vpop.f32.mrf.mxu0
  %886 = vdwg.mxu0
  %887 = vmatpush.bf16.msra.mxu0 %v163
  %888 = vmatpush.bf16.msra.mxu0 %v160
  %889 = vmatpush.bf16.msra.mxu0 %v157
  %890 = vmatpush.bf16.msra.mxu0 %v154
  %891 = vmatpush.bf16.msra.mxu0 %v151
  %892 = vmatpush.bf16.msra.mxu0 %v148
  %893 = vmatpush.bf16.msra.mxu0 %v145
  %894 = vmatpush.bf16.msra.mxu0 %v142
  %895 = vmatmul.bf16.gmra.mxu0 %v860
  %v896 = vpop.f32.mrf.mxu0
  %v897 = vadd.f32 0.0, %v896
  %v898 = vpop.f32.mrf.mxu0
  %899 = vdwg.mxu0
  %s900 = scalar_lea.vmem %s1, 84
  %v901 = vld [vmem:[%s900] sm:$0xff]
  %v902 = vld [vmem:[%s900 + $0x8] sm:$0xf]
  %v903 = vunpack.c.l.bf16 %v901
  %v904 = vunpack.c.h.bf16 %v901
  %v905 = vunpack.c.l.bf16 %v902
  %v906 = vadd.f32 %v903, %v871
  %v907 = vxor.u32 %v906, 2147483648
  %v908 = vmul.f32 %v907, 1.442695
  %v909 = vpow.pop %v908
  %v910 = vadd.f32 %v909, 1.0
  %v911 = vrcp.pop %v910
  %v912 = vmul.f32 %v910, %v911
  %v913 = vsub.f32 1.0, %v912
  %v914 = vmul.f32 %v911, %v913
  %v915 = vadd.f32 %v911, %v914
  %vm916 = vweird.f32 %v910
  %vm917 = vweird.f32 %v911
  %vm918 = vmor %vm916, %vm917
  %v919 = vsel %vm918, %v911, %v915
  %v920 = vand.u32 2147483647, %v910
  %vm921 = vcmp.eq.f32.partialorder %v920, 8.507059e+37
  %v922 = vand.u32 %v910, 2147483648
  %v923 = vor.u32 1.1754944e-38, %v922
  %v924 = vsel %vm921, %v923, %v919
  %v925 = vmul.f32 1.0, %v924
  %v926 = vadd.f32 %v904, %v884
  %v927 = vxor.u32 %v926, 2147483648
  %v928 = vmul.f32 %v927, 1.442695
  %v929 = vpow.pop %v928
  %v930 = vadd.f32 %v929, 1.0
  %v931 = vrcp.pop %v930
  %v932 = vmul.f32 %v930, %v931
  %v933 = vsub.f32 1.0, %v932
  %v934 = vmul.f32 %v931, %v933
  %v935 = vadd.f32 %v931, %v934
  %vm936 = vweird.f32 %v930
  %vm937 = vweird.f32 %v931
  %vm938 = vmor %vm936, %vm937
  %v939 = vsel %vm938, %v931, %v935
  %v940 = vand.u32 2147483647, %v930
  %vm941 = vcmp.eq.f32.partialorder %v940, 8.507059e+37
  %v942 = vand.u32 %v930, 2147483648
  %v943 = vor.u32 1.1754944e-38, %v942
  %v944 = vsel %vm941, %v943, %v939
  %v945 = vmul.f32 1.0, %v944
  %v946 = vadd.f32 %v897, %v273
  %v947 = vmul.f32 %v925, %v946
  %v948 = vadd.f32 %v905, %v947
  %v949 = vtanh.pop %v948
  %v950 = vsub.f32 1.0, %v945
  %v951 = vmul.f32 %v950, %v949
  %v952 = vmul.f32 %v945, %v857
  %v953 = vadd.f32 %v951, %v952
  %s954 = scalar_lea.vmem %s4, 56
  %955 = vst [vmem:[%s954] sm:$0xff] %v953
  %956 = vst [vmem:[#allocation2] sm:$0xff] %v953
  // Predicated region
  $region22: #{rnn_forward.8} parent=0 // pred_check
    %p957 = pneg %p19
  $region23: #{rnn_forward.8} parent=0 // pred_check_branch
    %959 = sbr.rel (%p957) target = $region25
  $region24: #{rnn_forward.8} parent=0 // pred_region
    %960 = vst [vmem:[%s5] sm:$0xff] %v953
  $region25: #{rnn_forward.8} parent=0 // pred_fallthru
    _
  // Predicated region
  $region26: #{rnn_forward.8} parent=0 // pred_check
    _
  $region27: #{rnn_forward.8} parent=0 // pred_check_branch
    %962 = sbr.rel (0) target = $region29
  $region28: #{rnn_forward.8} parent=0 // pred_region
    _
  $region29: #{rnn_forward.8} parent=0 // pred_fallthru
    _
  // Predicated region
  $region30: #{rnn_forward.8} parent=0 // pred_check
    _
  $region31: #{rnn_forward.8} parent=0 // pred_check_branch
    %964 = sbr.rel (0) target = $region33
  $region32: #{rnn_forward.8} parent=0 // pred_region
    _
  $region33: #{rnn_forward.8} parent=0 // pred_fallthru
    _
  // Predicated region
  $region34: #{rnn_forward.8} parent=0 // pred_check
    _
  $region35: #{rnn_forward.8} parent=0 // pred_check_branch
    %966 = sbr.rel (0) target = $region37
  $region36: #{rnn_forward.8} parent=0 // pred_region
    _
  $region37: #{rnn_forward.8} parent=0 // pred_fallthru
    _
  // Predicated region
  $region38: #{rnn_forward.8} parent=0 // pred_check
    _
  $region39: #{rnn_forward.8} parent=0 // pred_check_branch
    %968 = sbr.rel (0) target = $region41
  $region40: #{rnn_forward.8} parent=0 // pred_region
    _
  $region41: #{rnn_forward.8} parent=0 // pred_fallthru
    _

</llo_original>
